<compile_context>
chip_gen: v6e
topology: v6e:2x2x1
jax: 0.10.0
libtpu: 0.0.40
codegen_flags: <defaults>
</compile_context>

<pallas_src>
import jax
import jax.numpy as jnp
from jax.experimental import pallas as pl
from jax.experimental.pallas import tpu as pltpu

C1 = 0.01 ** 2
C2 = 0.03 ** 2


def _ssim_kernel(x_ref, y_ref, o_ref):
    # Blocks are (TN, H, W): TN planes in the leading dim, H in sublanes,
    # W dense in lanes.
    _, H, W = o_ref.shape

    x = x_ref[...].astype(jnp.float32)
    y = y_ref[...].astype(jnp.float32)

    def colsum(a):
        # 3-tap sum along H (sublane dim) with 1-pixel reflection fused in.
        # Interior rows are plain shifted slices; only the two boundary rows
        # need the reflected weight (a[0] + 2*a[1], a[H-1] + 2*a[H-2]).
        interior = a[:, 0:H - 2, :] + a[:, 1:H - 1, :] + a[:, 2:H, :]
        first = a[:, 0:1, :] + 2.0 * a[:, 1:2, :]
        last = a[:, H - 1:H, :] + 2.0 * a[:, H - 2:H - 1, :]
        return jnp.concatenate([first, interior, last], axis=1)

    def rowsum(a):
        # Same 3-tap reflected sum along W (lane dim).
        interior = a[:, :, 0:W - 2] + a[:, :, 1:W - 1] + a[:, :, 2:W]
        first = a[:, :, 0:1] + 2.0 * a[:, :, 1:2]
        last = a[:, :, W - 1:W] + 2.0 * a[:, :, W - 2:W - 1]
        return jnp.concatenate([first, interior, last], axis=2)

    def pool3_sum(a):
        # Raw (un-normalized) separable 3x3 box sum with reflection padding.
        # The 1/9 normalizations cancel algebraically below.
        return rowsum(colsum(a))

    sx = pool3_sum(x)
    sy = pool3_sum(y)
    sxx = pool3_sum(x * x)
    syy = pool3_sum(y * y)
    sxy = pool3_sum(x * y)

    sxsy = sx * sy
    sx2 = sx * sx
    sy2 = sy * sy

    # With mu = S/9 and sigma = (9*S2 - S^2)/81, the 81^2 normalization
    # cancels between numerator and denominator:
    #   n = (2*Sx*Sy + 81*C1) * (18*Sxy - 2*Sx*Sy + 81*C2)
    #   d = (Sx^2 + Sy^2 + 81*C1) * (9*(Sxx + Syy) - Sx^2 - Sy^2 + 81*C2)
    n = (2.0 * sxsy + 81.0 * C1) * (18.0 * sxy - 2.0 * sxsy + 81.0 * C2)
    d = (sx2 + sy2 + 81.0 * C1) * (9.0 * (sxx + syy) - sx2 - sy2 + 81.0 * C2)

    # NOTE: full-precision divide kept (pl.reciprocal(approx=True) would
    # introduce ~2.4e-4 relative error and fail the 1e-5 reference check).
    out = jnp.clip((1.0 - n / d) * 0.5, 0.0, 1.0)
    o_ref[...] = out.astype(o_ref.dtype)


def ssim_loss(x, y):
    """x, y: (B, C, H, W) float32.  Returns (B, C, H, W) SSIM loss map."""
    B, C, H, W = x.shape
    assert H >= 3 and W >= 3, "SSIM kernel assumes spatial dims >= 3"
    N = B * C

    # Free reshapes only (native memory order): no wrapper transposes.
    xr = x.reshape(N, H, W)
    yr = y.reshape(N, H, W)

    # Generation-aware VMEM sizing.
    try:
        vmem_cap = pltpu.get_tpu_info().vmem_capacity_bytes
    except Exception:  # no TPU query available (e.g. interpret on CPU host)
        vmem_cap = 64 * 1024 * 1024  # conservative: v7x per-core VMEM
    vmem_limit = int(vmem_cap * 0.75)
    block_budget = int(vmem_cap * 0.40)

    # ~20 live (tn, H, W) f32 blocks at peak: 6 pipeline buffers
    # (2 inputs x 2 + output x 2) plus ~13 in-kernel f32 temporaries.
    live_blocks = 20
    plane_bytes = H * W * 4
    tn_cap = max(1, block_budget // (live_blocks * plane_bytes))

    # At least 2 grid steps when N allows (so megacore/parallel has work on
    # both TensorCores), and enough steps to respect the VMEM budget.
    grid_n = max(min(N, 2), pl.cdiv(N, tn_cap))
    tn = pl.cdiv(N, grid_n)

    out = pl.pallas_call(
        _ssim_kernel,
        out_shape=jax.ShapeDtypeStruct((N, H, W), x.dtype),
        grid_spec=pltpu.PrefetchScalarGridSpec(
            num_scalar_prefetch=0,
            grid=(grid_n,),
            in_specs=[
                pl.BlockSpec((tn, H, W), lambda i: (i, 0, 0)),
                pl.BlockSpec((tn, H, W), lambda i: (i, 0, 0)),
            ],
            out_specs=pl.BlockSpec((tn, H, W), lambda i: (i, 0, 0)),
        ),
        compiler_params=pltpu.CompilerParams(
            dimension_semantics=("parallel",),
            vmem_limit_bytes=vmem_limit,
        ),
    )(xr, yr)

    return out.reshape(B, C, H, W)


def _ssim_reference(x, y):
    """Pure-JAX reference mirroring the PyTorch module exactly."""
    xp = jnp.pad(x, ((0, 0), (0, 0), (1, 1), (1, 1)), mode="reflect")
    yp = jnp.pad(y, ((0, 0), (0, 0), (1, 1), (1, 1)), mode="reflect")

    def pool(a):
        return jax.lax.reduce_window(
            a, 0.0, jax.lax.add, (1, 1, 3, 3), (1, 1, 1, 1), "VALID"
        ) / 9.0

    mu_x = pool(xp)
    mu_y = pool(yp)
    sigma_x = pool(xp * xp) - mu_x * mu_x
    sigma_y = pool(yp * yp) - mu_y * mu_y
    sigma_xy = pool(xp * yp) - mu_x * mu_y
    n = (2 * mu_x * mu_y + C1) * (2 * sigma_xy + C2)
    d = (mu_x ** 2 + mu_y ** 2 + C1) * (sigma_x + sigma_y + C2)
    return jnp.clip((1 - n / d) / 2, 0.0, 1.0)


if __name__ == "__main__":
    key = jax.random.PRNGKey(0)
    kx, ky = jax.random.split(key)
    B, C, H, W = 2, 4, 16, 16
    x = jax.random.uniform(kx, (B, C, H, W), dtype=jnp.float32)
    y = jax.random.uniform(ky, (B, C, H, W), dtype=jnp.float32)

    out = jax.block_until_ready(ssim_loss(x, y))
    ref = jax.block_until_ready(_ssim_reference(x, y))

    assert out.shape == (B, C, H, W)
    assert jnp.allclose(out, ref, atol=1e-5, rtol=1e-5), float(
        jnp.max(jnp.abs(out - ref))
    )
    print("KERNEL_OK")
</pallas_src>

<mosaic_0001>
module attributes {stable_mosaic.version = 11 : i64} {
  func.func @_ssim_kernel(%arg0: i32, %arg1: memref<4x16x16xf32, #tpu.memory_space<vmem>>, %arg2: memref<4x16x16xf32, #tpu.memory_space<vmem>>, %arg3: memref<4x16x16xf32, #tpu.memory_space<vmem>>) attributes {dimension_semantics = [#tpu.dimension_semantics<parallel>], iteration_bounds = array<i64: 2>, scalar_prefetch = 0 : i64, scratch_operands = 0 : i64, tpu.core_type = #tpu.core_type<tc>, window_params = [{transform_indices = @transform_0, window_bounds = array<i64: 4, 16, 16>}, {transform_indices = @transform_1, window_bounds = array<i64: 4, 16, 16>}, {transform_indices = @transform_2, window_bounds = array<i64: 4, 16, 16>}]} {
    %c0 = arith.constant 0 : index
    %c0_0 = arith.constant 0 : index
    %c0_1 = arith.constant 0 : index
    %0 = vector.load %arg1[%c0, %c0_0, %c0_1] : memref<4x16x16xf32, #tpu.memory_space<vmem>>, vector<4x16x16xf32>
    %c0_2 = arith.constant 0 : index
    %c0_3 = arith.constant 0 : index
    %c0_4 = arith.constant 0 : index
    %1 = vector.load %arg2[%c0_2, %c0_3, %c0_4] : memref<4x16x16xf32, #tpu.memory_space<vmem>>, vector<4x16x16xf32>
    %2 = vector.extract_strided_slice %0 {offsets = [0, 0, 0], sizes = [4, 14, 16], strides = [1, 1, 1]} : vector<4x16x16xf32> to vector<4x14x16xf32>
    %3 = vector.extract_strided_slice %0 {offsets = [0, 1, 0], sizes = [4, 14, 16], strides = [1, 1, 1]} : vector<4x16x16xf32> to vector<4x14x16xf32>
    %4 = arith.addf %2, %3 : vector<4x14x16xf32>
    %5 = vector.extract_strided_slice %0 {offsets = [0, 2, 0], sizes = [4, 14, 16], strides = [1, 1, 1]} : vector<4x16x16xf32> to vector<4x14x16xf32>
    %6 = arith.addf %4, %5 : vector<4x14x16xf32>
    %7 = vector.extract_strided_slice %0 {offsets = [0, 0, 0], sizes = [4, 1, 16], strides = [1, 1, 1]} : vector<4x16x16xf32> to vector<4x1x16xf32>
    %8 = vector.extract_strided_slice %0 {offsets = [0, 1, 0], sizes = [4, 1, 16], strides = [1, 1, 1]} : vector<4x16x16xf32> to vector<4x1x16xf32>
    %cst = arith.constant 2.000000e+00 : f32
    %9 = vector.broadcast %cst : f32 to vector<4x1x16xf32>
    %10 = arith.mulf %9, %8 : vector<4x1x16xf32>
    %11 = arith.addf %7, %10 : vector<4x1x16xf32>
    %12 = vector.extract_strided_slice %0 {offsets = [0, 15, 0], sizes = [4, 1, 16], strides = [1, 1, 1]} : vector<4x16x16xf32> to vector<4x1x16xf32>
    %13 = vector.extract_strided_slice %0 {offsets = [0, 14, 0], sizes = [4, 1, 16], strides = [1, 1, 1]} : vector<4x16x16xf32> to vector<4x1x16xf32>
    %cst_5 = arith.constant 2.000000e+00 : f32
    %14 = vector.broadcast %cst_5 : f32 to vector<4x1x16xf32>
    %15 = arith.mulf %14, %13 : vector<4x1x16xf32>
    %16 = arith.addf %12, %15 : vector<4x1x16xf32>
    %17 = tpu.concatenate %11, %6, %16 in 1 : vector<4x1x16xf32>, vector<4x14x16xf32>, vector<4x1x16xf32> -> vector<4x16x16xf32>
    %18 = vector.extract_strided_slice %17 {offsets = [0, 0, 0], sizes = [4, 16, 14], strides = [1, 1, 1]} : vector<4x16x16xf32> to vector<4x16x14xf32>
    %19 = vector.extract_strided_slice %17 {offsets = [0, 0, 1], sizes = [4, 16, 14], strides = [1, 1, 1]} : vector<4x16x16xf32> to vector<4x16x14xf32>
    %20 = arith.addf %18, %19 : vector<4x16x14xf32>
    %21 = vector.extract_strided_slice %17 {offsets = [0, 0, 2], sizes = [4, 16, 14], strides = [1, 1, 1]} : vector<4x16x16xf32> to vector<4x16x14xf32>
    %22 = arith.addf %20, %21 : vector<4x16x14xf32>
    %23 = vector.extract_strided_slice %17 {offsets = [0, 0, 0], sizes = [4, 16, 1], strides = [1, 1, 1]} : vector<4x16x16xf32> to vector<4x16x1xf32>
    %24 = vector.extract_strided_slice %17 {offsets = [0, 0, 1], sizes = [4, 16, 1], strides = [1, 1, 1]} : vector<4x16x16xf32> to vector<4x16x1xf32>
    %cst_6 = arith.constant 2.000000e+00 : f32
    %25 = vector.broadcast %cst_6 : f32 to vector<4x16x1xf32>
    %26 = arith.mulf %25, %24 : vector<4x16x1xf32>
    %27 = arith.addf %23, %26 : vector<4x16x1xf32>
    %28 = vector.extract_strided_slice %17 {offsets = [0, 0, 15], sizes = [4, 16, 1], strides = [1, 1, 1]} : vector<4x16x16xf32> to vector<4x16x1xf32>
    %29 = vector.extract_strided_slice %17 {offsets = [0, 0, 14], sizes = [4, 16, 1], strides = [1, 1, 1]} : vector<4x16x16xf32> to vector<4x16x1xf32>
    %cst_7 = arith.constant 2.000000e+00 : f32
    %30 = vector.broadcast %cst_7 : f32 to vector<4x16x1xf32>
    %31 = arith.mulf %30, %29 : vector<4x16x1xf32>
    %32 = arith.addf %28, %31 : vector<4x16x1xf32>
    %33 = tpu.concatenate %27, %22, %32 in 2 : vector<4x16x1xf32>, vector<4x16x14xf32>, vector<4x16x1xf32> -> vector<4x16x16xf32>
    %34 = vector.extract_strided_slice %1 {offsets = [0, 0, 0], sizes = [4, 14, 16], strides = [1, 1, 1]} : vector<4x16x16xf32> to vector<4x14x16xf32>
    %35 = vector.extract_strided_slice %1 {offsets = [0, 1, 0], sizes = [4, 14, 16], strides = [1, 1, 1]} : vector<4x16x16xf32> to vector<4x14x16xf32>
    %36 = arith.addf %34, %35 : vector<4x14x16xf32>
    %37 = vector.extract_strided_slice %1 {offsets = [0, 2, 0], sizes = [4, 14, 16], strides = [1, 1, 1]} : vector<4x16x16xf32> to vector<4x14x16xf32>
    %38 = arith.addf %36, %37 : vector<4x14x16xf32>
    %39 = vector.extract_strided_slice %1 {offsets = [0, 0, 0], sizes = [4, 1, 16], strides = [1, 1, 1]} : vector<4x16x16xf32> to vector<4x1x16xf32>
    %40 = vector.extract_strided_slice %1 {offsets = [0, 1, 0], sizes = [4, 1, 16], strides = [1, 1, 1]} : vector<4x16x16xf32> to vector<4x1x16xf32>
    %cst_8 = arith.constant 2.000000e+00 : f32
    %41 = vector.broadcast %cst_8 : f32 to vector<4x1x16xf32>
    %42 = arith.mulf %41, %40 : vector<4x1x16xf32>
    %43 = arith.addf %39, %42 : vector<4x1x16xf32>
    %44 = vector.extract_strided_slice %1 {offsets = [0, 15, 0], sizes = [4, 1, 16], strides = [1, 1, 1]} : vector<4x16x16xf32> to vector<4x1x16xf32>
    %45 = vector.extract_strided_slice %1 {offsets = [0, 14, 0], sizes = [4, 1, 16], strides = [1, 1, 1]} : vector<4x16x16xf32> to vector<4x1x16xf32>
    %cst_9 = arith.constant 2.000000e+00 : f32
    %46 = vector.broadcast %cst_9 : f32 to vector<4x1x16xf32>
    %47 = arith.mulf %46, %45 : vector<4x1x16xf32>
    %48 = arith.addf %44, %47 : vector<4x1x16xf32>
    %49 = tpu.concatenate %43, %38, %48 in 1 : vector<4x1x16xf32>, vector<4x14x16xf32>, vector<4x1x16xf32> -> vector<4x16x16xf32>
    %50 = vector.extract_strided_slice %49 {offsets = [0, 0, 0], sizes = [4, 16, 14], strides = [1, 1, 1]} : vector<4x16x16xf32> to vector<4x16x14xf32>
    %51 = vector.extract_strided_slice %49 {offsets = [0, 0, 1], sizes = [4, 16, 14], strides = [1, 1, 1]} : vector<4x16x16xf32> to vector<4x16x14xf32>
    %52 = arith.addf %50, %51 : vector<4x16x14xf32>
    %53 = vector.extract_strided_slice %49 {offsets = [0, 0, 2], sizes = [4, 16, 14], strides = [1, 1, 1]} : vector<4x16x16xf32> to vector<4x16x14xf32>
    %54 = arith.addf %52, %53 : vector<4x16x14xf32>
    %55 = vector.extract_strided_slice %49 {offsets = [0, 0, 0], sizes = [4, 16, 1], strides = [1, 1, 1]} : vector<4x16x16xf32> to vector<4x16x1xf32>
    %56 = vector.extract_strided_slice %49 {offsets = [0, 0, 1], sizes = [4, 16, 1], strides = [1, 1, 1]} : vector<4x16x16xf32> to vector<4x16x1xf32>
    %cst_10 = arith.constant 2.000000e+00 : f32
    %57 = vector.broadcast %cst_10 : f32 to vector<4x16x1xf32>
    %58 = arith.mulf %57, %56 : vector<4x16x1xf32>
    %59 = arith.addf %55, %58 : vector<4x16x1xf32>
    %60 = vector.extract_strided_slice %49 {offsets = [0, 0, 15], sizes = [4, 16, 1], strides = [1, 1, 1]} : vector<4x16x16xf32> to vector<4x16x1xf32>
    %61 = vector.extract_strided_slice %49 {offsets = [0, 0, 14], sizes = [4, 16, 1], strides = [1, 1, 1]} : vector<4x16x16xf32> to vector<4x16x1xf32>
    %cst_11 = arith.constant 2.000000e+00 : f32
    %62 = vector.broadcast %cst_11 : f32 to vector<4x16x1xf32>
    %63 = arith.mulf %62, %61 : vector<4x16x1xf32>
    %64 = arith.addf %60, %63 : vector<4x16x1xf32>
    %65 = tpu.concatenate %59, %54, %64 in 2 : vector<4x16x1xf32>, vector<4x16x14xf32>, vector<4x16x1xf32> -> vector<4x16x16xf32>
    %66 = arith.mulf %0, %0 : vector<4x16x16xf32>
    %67 = vector.extract_strided_slice %66 {offsets = [0, 0, 0], sizes = [4, 14, 16], strides = [1, 1, 1]} : vector<4x16x16xf32> to vector<4x14x16xf32>
    %68 = vector.extract_strided_slice %66 {offsets = [0, 1, 0], sizes = [4, 14, 16], strides = [1, 1, 1]} : vector<4x16x16xf32> to vector<4x14x16xf32>
    %69 = arith.addf %67, %68 : vector<4x14x16xf32>
    %70 = vector.extract_strided_slice %66 {offsets = [0, 2, 0], sizes = [4, 14, 16], strides = [1, 1, 1]} : vector<4x16x16xf32> to vector<4x14x16xf32>
    %71 = arith.addf %69, %70 : vector<4x14x16xf32>
    %72 = vector.extract_strided_slice %66 {offsets = [0, 0, 0], sizes = [4, 1, 16], strides = [1, 1, 1]} : vector<4x16x16xf32> to vector<4x1x16xf32>
    %73 = vector.extract_strided_slice %66 {offsets = [0, 1, 0], sizes = [4, 1, 16], strides = [1, 1, 1]} : vector<4x16x16xf32> to vector<4x1x16xf32>
    %cst_12 = arith.constant 2.000000e+00 : f32
    %74 = vector.broadcast %cst_12 : f32 to vector<4x1x16xf32>
    %75 = arith.mulf %74, %73 : vector<4x1x16xf32>
    %76 = arith.addf %72, %75 : vector<4x1x16xf32>
    %77 = vector.extract_strided_slice %66 {offsets = [0, 15, 0], sizes = [4, 1, 16], strides = [1, 1, 1]} : vector<4x16x16xf32> to vector<4x1x16xf32>
    %78 = vector.extract_strided_slice %66 {offsets = [0, 14, 0], sizes = [4, 1, 16], strides = [1, 1, 1]} : vector<4x16x16xf32> to vector<4x1x16xf32>
    %cst_13 = arith.constant 2.000000e+00 : f32
    %79 = vector.broadcast %cst_13 : f32 to vector<4x1x16xf32>
    %80 = arith.mulf %79, %78 : vector<4x1x16xf32>
    %81 = arith.addf %77, %80 : vector<4x1x16xf32>
    %82 = tpu.concatenate %76, %71, %81 in 1 : vector<4x1x16xf32>, vector<4x14x16xf32>, vector<4x1x16xf32> -> vector<4x16x16xf32>
    %83 = vector.extract_strided_slice %82 {offsets = [0, 0, 0], sizes = [4, 16, 14], strides = [1, 1, 1]} : vector<4x16x16xf32> to vector<4x16x14xf32>
    %84 = vector.extract_strided_slice %82 {offsets = [0, 0, 1], sizes = [4, 16, 14], strides = [1, 1, 1]} : vector<4x16x16xf32> to vector<4x16x14xf32>
    %85 = arith.addf %83, %84 : vector<4x16x14xf32>
    %86 = vector.extract_strided_slice %82 {offsets = [0, 0, 2], sizes = [4, 16, 14], strides = [1, 1, 1]} : vector<4x16x16xf32> to vector<4x16x14xf32>
    %87 = arith.addf %85, %86 : vector<4x16x14xf32>
    %88 = vector.extract_strided_slice %82 {offsets = [0, 0, 0], sizes = [4, 16, 1], strides = [1, 1, 1]} : vector<4x16x16xf32> to vector<4x16x1xf32>
    %89 = vector.extract_strided_slice %82 {offsets = [0, 0, 1], sizes = [4, 16, 1], strides = [1, 1, 1]} : vector<4x16x16xf32> to vector<4x16x1xf32>
    %cst_14 = arith.constant 2.000000e+00 : f32
    %90 = vector.broadcast %cst_14 : f32 to vector<4x16x1xf32>
    %91 = arith.mulf %90, %89 : vector<4x16x1xf32>
    %92 = arith.addf %88, %91 : vector<4x16x1xf32>
    %93 = vector.extract_strided_slice %82 {offsets = [0, 0, 15], sizes = [4, 16, 1], strides = [1, 1, 1]} : vector<4x16x16xf32> to vector<4x16x1xf32>
    %94 = vector.extract_strided_slice %82 {offsets = [0, 0, 14], sizes = [4, 16, 1], strides = [1, 1, 1]} : vector<4x16x16xf32> to vector<4x16x1xf32>
    %cst_15 = arith.constant 2.000000e+00 : f32
    %95 = vector.broadcast %cst_15 : f32 to vector<4x16x1xf32>
    %96 = arith.mulf %95, %94 : vector<4x16x1xf32>
    %97 = arith.addf %93, %96 : vector<4x16x1xf32>
    %98 = tpu.concatenate %92, %87, %97 in 2 : vector<4x16x1xf32>, vector<4x16x14xf32>, vector<4x16x1xf32> -> vector<4x16x16xf32>
    %99 = arith.mulf %1, %1 : vector<4x16x16xf32>
    %100 = vector.extract_strided_slice %99 {offsets = [0, 0, 0], sizes = [4, 14, 16], strides = [1, 1, 1]} : vector<4x16x16xf32> to vector<4x14x16xf32>
    %101 = vector.extract_strided_slice %99 {offsets = [0, 1, 0], sizes = [4, 14, 16], strides = [1, 1, 1]} : vector<4x16x16xf32> to vector<4x14x16xf32>
    %102 = arith.addf %100, %101 : vector<4x14x16xf32>
    %103 = vector.extract_strided_slice %99 {offsets = [0, 2, 0], sizes = [4, 14, 16], strides = [1, 1, 1]} : vector<4x16x16xf32> to vector<4x14x16xf32>
    %104 = arith.addf %102, %103 : vector<4x14x16xf32>
    %105 = vector.extract_strided_slice %99 {offsets = [0, 0, 0], sizes = [4, 1, 16], strides = [1, 1, 1]} : vector<4x16x16xf32> to vector<4x1x16xf32>
    %106 = vector.extract_strided_slice %99 {offsets = [0, 1, 0], sizes = [4, 1, 16], strides = [1, 1, 1]} : vector<4x16x16xf32> to vector<4x1x16xf32>
    %cst_16 = arith.constant 2.000000e+00 : f32
    %107 = vector.broadcast %cst_16 : f32 to vector<4x1x16xf32>
    %108 = arith.mulf %107, %106 : vector<4x1x16xf32>
    %109 = arith.addf %105, %108 : vector<4x1x16xf32>
    %110 = vector.extract_strided_slice %99 {offsets = [0, 15, 0], sizes = [4, 1, 16], strides = [1, 1, 1]} : vector<4x16x16xf32> to vector<4x1x16xf32>
    %111 = vector.extract_strided_slice %99 {offsets = [0, 14, 0], sizes = [4, 1, 16], strides = [1, 1, 1]} : vector<4x16x16xf32> to vector<4x1x16xf32>
    %cst_17 = arith.constant 2.000000e+00 : f32
    %112 = vector.broadcast %cst_17 : f32 to vector<4x1x16xf32>
    %113 = arith.mulf %112, %111 : vector<4x1x16xf32>
    %114 = arith.addf %110, %113 : vector<4x1x16xf32>
    %115 = tpu.concatenate %109, %104, %114 in 1 : vector<4x1x16xf32>, vector<4x14x16xf32>, vector<4x1x16xf32> -> vector<4x16x16xf32>
    %116 = vector.extract_strided_slice %115 {offsets = [0, 0, 0], sizes = [4, 16, 14], strides = [1, 1, 1]} : vector<4x16x16xf32> to vector<4x16x14xf32>
    %117 = vector.extract_strided_slice %115 {offsets = [0, 0, 1], sizes = [4, 16, 14], strides = [1, 1, 1]} : vector<4x16x16xf32> to vector<4x16x14xf32>
    %118 = arith.addf %116, %117 : vector<4x16x14xf32>
    %119 = vector.extract_strided_slice %115 {offsets = [0, 0, 2], sizes = [4, 16, 14], strides = [1, 1, 1]} : vector<4x16x16xf32> to vector<4x16x14xf32>
    %120 = arith.addf %118, %119 : vector<4x16x14xf32>
    %121 = vector.extract_strided_slice %115 {offsets = [0, 0, 0], sizes = [4, 16, 1], strides = [1, 1, 1]} : vector<4x16x16xf32> to vector<4x16x1xf32>
    %122 = vector.extract_strided_slice %115 {offsets = [0, 0, 1], sizes = [4, 16, 1], strides = [1, 1, 1]} : vector<4x16x16xf32> to vector<4x16x1xf32>
    %cst_18 = arith.constant 2.000000e+00 : f32
    %123 = vector.broadcast %cst_18 : f32 to vector<4x16x1xf32>
    %124 = arith.mulf %123, %122 : vector<4x16x1xf32>
    %125 = arith.addf %121, %124 : vector<4x16x1xf32>
    %126 = vector.extract_strided_slice %115 {offsets = [0, 0, 15], sizes = [4, 16, 1], strides = [1, 1, 1]} : vector<4x16x16xf32> to vector<4x16x1xf32>
    %127 = vector.extract_strided_slice %115 {offsets = [0, 0, 14], sizes = [4, 16, 1], strides = [1, 1, 1]} : vector<4x16x16xf32> to vector<4x16x1xf32>
    %cst_19 = arith.constant 2.000000e+00 : f32
    %128 = vector.broadcast %cst_19 : f32 to vector<4x16x1xf32>
    %129 = arith.mulf %128, %127 : vector<4x16x1xf32>
    %130 = arith.addf %126, %129 : vector<4x16x1xf32>
    %131 = tpu.concatenate %125, %120, %130 in 2 : vector<4x16x1xf32>, vector<4x16x14xf32>, vector<4x16x1xf32> -> vector<4x16x16xf32>
    %132 = arith.mulf %0, %1 : vector<4x16x16xf32>
    %133 = vector.extract_strided_slice %132 {offsets = [0, 0, 0], sizes = [4, 14, 16], strides = [1, 1, 1]} : vector<4x16x16xf32> to vector<4x14x16xf32>
    %134 = vector.extract_strided_slice %132 {offsets = [0, 1, 0], sizes = [4, 14, 16], strides = [1, 1, 1]} : vector<4x16x16xf32> to vector<4x14x16xf32>
    %135 = arith.addf %133, %134 : vector<4x14x16xf32>
    %136 = vector.extract_strided_slice %132 {offsets = [0, 2, 0], sizes = [4, 14, 16], strides = [1, 1, 1]} : vector<4x16x16xf32> to vector<4x14x16xf32>
    %137 = arith.addf %135, %136 : vector<4x14x16xf32>
    %138 = vector.extract_strided_slice %132 {offsets = [0, 0, 0], sizes = [4, 1, 16], strides = [1, 1, 1]} : vector<4x16x16xf32> to vector<4x1x16xf32>
    %139 = vector.extract_strided_slice %132 {offsets = [0, 1, 0], sizes = [4, 1, 16], strides = [1, 1, 1]} : vector<4x16x16xf32> to vector<4x1x16xf32>
    %cst_20 = arith.constant 2.000000e+00 : f32
    %140 = vector.broadcast %cst_20 : f32 to vector<4x1x16xf32>
    %141 = arith.mulf %140, %139 : vector<4x1x16xf32>
    %142 = arith.addf %138, %141 : vector<4x1x16xf32>
    %143 = vector.extract_strided_slice %132 {offsets = [0, 15, 0], sizes = [4, 1, 16], strides = [1, 1, 1]} : vector<4x16x16xf32> to vector<4x1x16xf32>
    %144 = vector.extract_strided_slice %132 {offsets = [0, 14, 0], sizes = [4, 1, 16], strides = [1, 1, 1]} : vector<4x16x16xf32> to vector<4x1x16xf32>
    %cst_21 = arith.constant 2.000000e+00 : f32
    %145 = vector.broadcast %cst_21 : f32 to vector<4x1x16xf32>
    %146 = arith.mulf %145, %144 : vector<4x1x16xf32>
    %147 = arith.addf %143, %146 : vector<4x1x16xf32>
    %148 = tpu.concatenate %142, %137, %147 in 1 : vector<4x1x16xf32>, vector<4x14x16xf32>, vector<4x1x16xf32> -> vector<4x16x16xf32>
    %149 = vector.extract_strided_slice %148 {offsets = [0, 0, 0], sizes = [4, 16, 14], strides = [1, 1, 1]} : vector<4x16x16xf32> to vector<4x16x14xf32>
    %150 = vector.extract_strided_slice %148 {offsets = [0, 0, 1], sizes = [4, 16, 14], strides = [1, 1, 1]} : vector<4x16x16xf32> to vector<4x16x14xf32>
    %151 = arith.addf %149, %150 : vector<4x16x14xf32>
    %152 = vector.extract_strided_slice %148 {offsets = [0, 0, 2], sizes = [4, 16, 14], strides = [1, 1, 1]} : vector<4x16x16xf32> to vector<4x16x14xf32>
    %153 = arith.addf %151, %152 : vector<4x16x14xf32>
    %154 = vector.extract_strided_slice %148 {offsets = [0, 0, 0], sizes = [4, 16, 1], strides = [1, 1, 1]} : vector<4x16x16xf32> to vector<4x16x1xf32>
    %155 = vector.extract_strided_slice %148 {offsets = [0, 0, 1], sizes = [4, 16, 1], strides = [1, 1, 1]} : vector<4x16x16xf32> to vector<4x16x1xf32>
    %cst_22 = arith.constant 2.000000e+00 : f32
    %156 = vector.broadcast %cst_22 : f32 to vector<4x16x1xf32>
    %157 = arith.mulf %156, %155 : vector<4x16x1xf32>
    %158 = arith.addf %154, %157 : vector<4x16x1xf32>
    %159 = vector.extract_strided_slice %148 {offsets = [0, 0, 15], sizes = [4, 16, 1], strides = [1, 1, 1]} : vector<4x16x16xf32> to vector<4x16x1xf32>
    %160 = vector.extract_strided_slice %148 {offsets = [0, 0, 14], sizes = [4, 16, 1], strides = [1, 1, 1]} : vector<4x16x16xf32> to vector<4x16x1xf32>
    %cst_23 = arith.constant 2.000000e+00 : f32
    %161 = vector.broadcast %cst_23 : f32 to vector<4x16x1xf32>
    %162 = arith.mulf %161, %160 : vector<4x16x1xf32>
    %163 = arith.addf %159, %162 : vector<4x16x1xf32>
    %164 = tpu.concatenate %158, %153, %163 in 2 : vector<4x16x1xf32>, vector<4x16x14xf32>, vector<4x16x1xf32> -> vector<4x16x16xf32>
    %165 = arith.mulf %33, %65 : vector<4x16x16xf32>
    %166 = arith.mulf %33, %33 : vector<4x16x16xf32>
    %167 = arith.mulf %65, %65 : vector<4x16x16xf32>
    %cst_24 = arith.constant 2.000000e+00 : f32
    %168 = vector.broadcast %cst_24 : f32 to vector<4x16x16xf32>
    %169 = arith.mulf %168, %165 : vector<4x16x16xf32>
    %cst_25 = arith.constant 8.100000e-03 : f32
    %170 = vector.broadcast %cst_25 : f32 to vector<4x16x16xf32>
    %171 = arith.addf %169, %170 : vector<4x16x16xf32>
    %cst_26 = arith.constant 1.800000e+01 : f32
    %172 = vector.broadcast %cst_26 : f32 to vector<4x16x16xf32>
    %173 = arith.mulf %172, %164 : vector<4x16x16xf32>
    %cst_27 = arith.constant 2.000000e+00 : f32
    %174 = vector.broadcast %cst_27 : f32 to vector<4x16x16xf32>
    %175 = arith.mulf %174, %165 : vector<4x16x16xf32>
    %176 = arith.subf %173, %175 : vector<4x16x16xf32>
    %cst_28 = arith.constant 7.290000e-02 : f32
    %177 = vector.broadcast %cst_28 : f32 to vector<4x16x16xf32>
    %178 = arith.addf %176, %177 : vector<4x16x16xf32>
    %179 = arith.mulf %171, %178 : vector<4x16x16xf32>
    %180 = arith.addf %166, %167 : vector<4x16x16xf32>
    %cst_29 = arith.constant 8.100000e-03 : f32
    %181 = vector.broadcast %cst_29 : f32 to vector<4x16x16xf32>
    %182 = arith.addf %180, %181 : vector<4x16x16xf32>
    %183 = arith.addf %98, %131 : vector<4x16x16xf32>
    %cst_30 = arith.constant 9.000000e+00 : f32
    %184 = vector.broadcast %cst_30 : f32 to vector<4x16x16xf32>
    %185 = arith.mulf %184, %183 : vector<4x16x16xf32>
    %186 = arith.subf %185, %166 : vector<4x16x16xf32>
    %187 = arith.subf %186, %167 : vector<4x16x16xf32>
    %cst_31 = arith.constant 7.290000e-02 : f32
    %188 = vector.broadcast %cst_31 : f32 to vector<4x16x16xf32>
    %189 = arith.addf %187, %188 : vector<4x16x16xf32>
    %190 = arith.mulf %182, %189 : vector<4x16x16xf32>
    %191 = arith.divf %179, %190 : vector<4x16x16xf32>
    %cst_32 = arith.constant 1.000000e+00 : f32
    %192 = vector.broadcast %cst_32 : f32 to vector<4x16x16xf32>
    %193 = arith.subf %192, %191 : vector<4x16x16xf32>
    %cst_33 = arith.constant 5.000000e-01 : f32
    %194 = vector.broadcast %cst_33 : f32 to vector<4x16x16xf32>
    %195 = arith.mulf %193, %194 : vector<4x16x16xf32>
    %cst_34 = arith.constant 0.000000e+00 : f32
    %cst_35 = arith.constant 1.000000e+00 : f32
    %196 = vector.broadcast %cst_34 : f32 to vector<4x16x16xf32>
    %197 = arith.maximumf %196, %195 : vector<4x16x16xf32>
    %198 = vector.broadcast %cst_35 : f32 to vector<4x16x16xf32>
    %199 = arith.minimumf %198, %197 : vector<4x16x16xf32>
    %c0_36 = arith.constant 0 : index
    %c0_37 = arith.constant 0 : index
    %c0_38 = arith.constant 0 : index
    %200 = vector.load %arg3[%c0_36, %c0_37, %c0_38] : memref<4x16x16xf32, #tpu.memory_space<vmem>>, vector<4x16x16xf32>
    tpu.vector_store %arg3[%c0_36, %c0_37, %c0_38], %199 {strides = array<i32>} : memref<4x16x16xf32, #tpu.memory_space<vmem>>, vector<4x16x16xf32>,
    return
  }
  func.func @transform_0(%arg0: i32) -> (i32, i32, i32) {
    %c0_i32 = arith.constant 0 : i32
    %c0_i32_0 = arith.constant 0 : i32
    %c0_i32_1 = arith.constant 0 : i32
    return %arg0, %c0_i32, %c0_i32_0 : i32, i32, i32
  }
  func.func @transform_1(%arg0: i32) -> (i32, i32, i32) {
    %c0_i32 = arith.constant 0 : i32
    %c0_i32_0 = arith.constant 0 : i32
    %c0_i32_1 = arith.constant 0 : i32
    return %arg0, %c0_i32, %c0_i32_0 : i32, i32, i32
  }
  func.func @transform_2(%arg0: i32) -> (i32, i32, i32) {
    %c0_i32 = arith.constant 0 : i32
    %c0_i32_0 = arith.constant 0 : i32
    %c0_i32_1 = arith.constant 0 : i32
    return %arg0, %c0_i32, %c0_i32_0 : i32, i32, i32
  }
}

</mosaic_0001>

<llo_original>
// kernel: tpu_custom_call.1
$region0: #{tpu_custom_call.1}
  #allocation0 [shape = 'u32[]', space=smem, size = 0x4, offset = 0x4, fixed_abs, tag = 'smem constant byte address 0x4 - core index']
  #allocation1 [shape = 'u32[144,128]{1,0:T(1,128)}', space=vmem, size = 0x12000, scoped, tag = 'internal scratch']
  %s0 = inlined_call_operand.hbm [shape: f32[8,16,16], index: 0, kind: input, shape index: {}]
  %s1 = inlined_call_operand.hbm [shape: f32[8,16,16], index: 1, kind: input, shape index: {}]
  %s2 = inlined_call_operand.hbm [shape: f32[8,16,16], index: 2, kind: output, shape index: {}]
  %s3 = sld [smem:[#allocation0]]
  $region49: #{tpu_custom_call.1} parent=0
    _
  %s5 = ssub.s32 1, %s3
  %s6 = scalar_select 0, %s5, %s3
  $region1: #{tpu_custom_call.1} parent=0
    #allocation2 [shape = 'u8[65536]{0}', space=vmem, size = 0x10000, scoped, tag = 'input window, operand 0']
    #allocation3 [shape = 's32[2]{0}', space=sflag, size = 0x8, scoped, tag = 'scoped memory for tpu_custom_call.1']
    #allocation4 [shape = 's32[2]{0}', space=sflag, size = 0x8, scoped, tag = 'scoped memory for tpu_custom_call.1']
    #allocation5 [shape = 'u8[65536]{0}', space=vmem, size = 0x10000, scoped, tag = 'input window, operand 1']
    #allocation6 [shape = 's32[2]{0}', space=sflag, size = 0x8, scoped, tag = 'scoped memory for tpu_custom_call.1']
    #allocation7 [shape = 'u8[65536]{0}', space=vmem, size = 0x10000, scoped, tag = 'output window, operand 0']
    %7 = vsyncpa [#allocation3], 0
    %s8 = scalar_lea.sflag [#allocation3], 1
    %9 = vsyncpa %s8, 0
    %10 = vsyncpa [#allocation6], 0
    %s11 = scalar_lea.sflag [#allocation6], 1
    %12 = vsyncpa %s11, 0
    %13 = vsyncpa [#allocation4], 0
    %s14 = scalar_lea.sflag [#allocation4], 1
    %15 = vsyncpa %s14, 0
    loop: start=0, step=1, limit=4
    $region2: #{tpu_custom_call.1} parent=1 // loop_pre_header
      _
    $region3: #{tpu_custom_call.1} parent=1 // loop_header
      %s17 = sphi 0, %s21
      %p18 = scmp.ge.s32.totalorder %s17, 4
      %s27 = sphi 0, %s29
      %s30 = sphi 0, %s27
      %s31 = sphi 0, %s30
      %s47 = sphi 0, %s31
      %s53 = sphi 0, %s55
      %s56 = sphi 0, %s53
      %s57 = sphi 0, %s56
      %s73 = sphi 0, %s57
      %s79 = sphi 0, %s81
      %s82 = sphi 0, %s79
      %s83 = sphi 0, %s82
      %s99 = sphi 0, %s83
    $region4: #{tpu_custom_call.1} parent=1 // loop_header_branch
      %20 = sbr.rel (%p18) target = $region8
    $region5: #{tpu_custom_call.1} parent=1 // loop_body
      %s22 = ssub.s32 %s17, 1
      %s23 = ssub.s32 %s17, 2
      %s24 = sadd.s32 %s17, 1
      %s25 = ssub.s32 %s17, %s24
      %p26 = scmp.eq.s32.totalorder %s25, 0
      %s28 = sadd.s32 %s27, 1
      %s29 = scalar_select %p26, %s27, %s28
      %p32 = pneg %p26
      %p33 = scmp.eq.s32.totalorder %s17, 1
      %p34 = por %p32, %p33
      %p35 = scmp.ne.s32.totalorder %s27, %s30
      %p36 = scmp.eq.s32.totalorder %s17, 0
      %p37 = por %p35, %p36
      %p38 = scmp.ne.s32.totalorder %s27, %s30
      %p39 = scmp.eq.s32.totalorder %s22, 1
      %p40 = por %p38, %p39
      %p41 = scmp.ne.s32.totalorder %s30, %s31
      %p42 = scmp.eq.s32.totalorder %s22, 0
      %p43 = por %p41, %p42
      %p44 = scmp.ne.s32.totalorder %s30, %s31
      %p45 = scmp.eq.s32.totalorder %s23, 1
      %p46 = por %p44, %p45
      %p48 = scmp.ne.s32.totalorder %s31, %s47
      %p49 = scmp.eq.s32.totalorder %s23, 0
      %p50 = por %p48, %p49
      %s51 = ssub.s32 %s17, %s24
      %p52 = scmp.eq.s32.totalorder %s51, 0
      %s54 = sadd.s32 %s53, 1
      %s55 = scalar_select %p52, %s53, %s54
      %p58 = pneg %p52
      %p59 = scmp.eq.s32.totalorder %s17, 1
      %p60 = por %p58, %p59
      %p61 = scmp.ne.s32.totalorder %s53, %s56
      %p62 = scmp.eq.s32.totalorder %s17, 0
      %p63 = por %p61, %p62
      %p64 = scmp.ne.s32.totalorder %s53, %s56
      %p65 = scmp.eq.s32.totalorder %s22, 1
      %p66 = por %p64, %p65
      %p67 = scmp.ne.s32.totalorder %s56, %s57
      %p68 = scmp.eq.s32.totalorder %s22, 0
      %p69 = por %p67, %p68
      %p70 = scmp.ne.s32.totalorder %s56, %s57
      %p71 = scmp.eq.s32.totalorder %s23, 1
      %p72 = por %p70, %p71
      %p74 = scmp.ne.s32.totalorder %s57, %s73
      %p75 = scmp.eq.s32.totalorder %s23, 0
      %p76 = por %p74, %p75
      %s77 = ssub.s32 %s17, %s24
      %p78 = scmp.eq.s32.totalorder %s77, 0
      %s80 = sadd.s32 %s79, 1
      %s81 = scalar_select %p78, %s79, %s80
      %p84 = pneg %p78
      %p85 = scmp.eq.s32.totalorder %s17, 1
      %p86 = por %p84, %p85
      %p87 = scmp.ne.s32.totalorder %s79, %s82
      %p88 = scmp.eq.s32.totalorder %s17, 0
      %p89 = por %p87, %p88
      %p90 = scmp.ne.s32.totalorder %s79, %s82
      %p91 = scmp.eq.s32.totalorder %s22, 1
      %p92 = por %p90, %p91
      %p93 = scmp.ne.s32.totalorder %s82, %s83
      %p94 = scmp.eq.s32.totalorder %s22, 0
      %p95 = por %p93, %p94
      %p96 = scmp.ne.s32.totalorder %s82, %s83
      %p97 = scmp.eq.s32.totalorder %s23, 1
      %p98 = por %p96, %p97
      %p100 = scmp.ne.s32.totalorder %s83, %s99
      %p101 = scmp.eq.s32.totalorder %s23, 0
      %p102 = por %p100, %p101
      %p103 = scmp.le.s32.totalorder 1, %s17
      %p104 = scmp.lt.s32.totalorder %s17, 3
      %p105 = pnand %p103, %p104
      %p106 = pneg %p105
      // Predicated region
      $region9: #{tpu_custom_call.1} parent=5 // pred_check
        _
      $region10: #{tpu_custom_call.1} parent=5 // pred_check_branch
        %108 = sbr.rel (%p105) target = $region12
      $region11: #{tpu_custom_call.1} parent=5 // pred_region
        %s109 = ssub.s32 %s17, 1
      $region12: #{tpu_custom_call.1} parent=5 // pred_fallthru
        _
      %p110 = scmp.lt.s32.totalorder %s17, 2
      // Predicated region
      $region13: #{tpu_custom_call.1} parent=5 // pred_check
        %p111 = pneg %p110
      $region14: #{tpu_custom_call.1} parent=5 // pred_check_branch
        %113 = sbr.rel (%p111) target = $region16
      $region15: #{tpu_custom_call.1} parent=5 // pred_region
        // Predicated region
        $region17: #{tpu_custom_call.1} parent=15 // pred_check
          %p114 = pneg %p37
        $region18: #{tpu_custom_call.1} parent=15 // pred_check_branch
          %116 = sbr.rel (%p114) target = $region20
        $region19: #{tpu_custom_call.1} parent=15 // pred_region
          %s117 = sand.u32 %s27, 1
          %s118 = scalar_lea.sflag [#allocation3], %s117
          %s119 = sand.u32 %s27, 1
          %s120 = smul.addr %s119, 64
          %s121 = scalar_lea.vmem [#allocation2], %s120
          %s122 = smul.u32 4, %s17
          %s124 = ssub.s32 1024, 1024
          %125 = vsyncadd %s118, %s124
          %s126 = smul.addr %s122, 2
          %s127 = smul.addr %s126, 128
          %s128 = scalar_lea.hbm %s0, %s127
          %s129 = sshll.u32 %s121, 4
          %s130 = int_to_ptr.vmem [resolvable:$true] %s129
          %135 = dma.hbm_to_vmem [thread:$0]  %s128, 1024, %s130, %s118, 128, 128, 8
        $region20: #{tpu_custom_call.1} parent=15 // pred_fallthru
          _
        // Predicated region
        $region21: #{tpu_custom_call.1} parent=15 // pred_check
          %p136 = pneg %p63
        $region22: #{tpu_custom_call.1} parent=15 // pred_check_branch
          %138 = sbr.rel (%p136) target = $region24
        $region23: #{tpu_custom_call.1} parent=15 // pred_region
          %s139 = sand.u32 %s53, 1
          %s140 = scalar_lea.sflag [#allocation6], %s139
          %s141 = sand.u32 %s53, 1
          %s142 = smul.addr %s141, 64
          %s143 = scalar_lea.vmem [#allocation5], %s142
          %s144 = smul.u32 4, %s17
          %s146 = ssub.s32 1024, 1024
          %147 = vsyncadd %s140, %s146
          %s148 = smul.addr %s144, 2
          %s149 = smul.addr %s148, 128
          %s150 = scalar_lea.hbm %s1, %s149
          %s151 = sshll.u32 %s143, 4
          %s152 = int_to_ptr.vmem [resolvable:$true] %s151
          %157 = dma.hbm_to_vmem [thread:$0]  %s150, 1024, %s152, %s140, 128, 128, 8
        $region24: #{tpu_custom_call.1} parent=15 // pred_fallthru
          _
      $region16: #{tpu_custom_call.1} parent=5 // pred_fallthru
        _
      %p158 = scmp.le.s32.totalorder 1, %s17
      %p159 = scmp.lt.s32.totalorder %s17, 3
      %p160 = pnand %p158, %p159
      %p161 = pneg %p160
      // Predicated region
      $region25: #{tpu_custom_call.1} parent=5 // pred_check
        _
      $region26: #{tpu_custom_call.1} parent=5 // pred_check_branch
        %163 = sbr.rel (%p160) target = $region28
      $region27: #{tpu_custom_call.1} parent=5 // pred_region
        %s164 = ssub.s32 %s17, 1
        %s165 = sand.u32 %s30, 1
        %s166 = scalar_lea.sflag [#allocation3], %s165
        %s167 = sand.u32 %s30, 1
        %s168 = smul.addr %s167, 64
        %s169 = scalar_lea.vmem [#allocation2], %s168
        // Predicated region
        $region29: #{tpu_custom_call.1} parent=27 // pred_check
          %p170 = pneg %p43
        $region30: #{tpu_custom_call.1} parent=27 // pred_check_branch
          %172 = sbr.rel (%p170) target = $region32
        $region31: #{tpu_custom_call.1} parent=27 // pred_region
          %173 = dma.done %s166, 1024
        $region32: #{tpu_custom_call.1} parent=27 // pred_fallthru
          _
        %s174 = sand.u32 %s56, 1
        %s175 = scalar_lea.sflag [#allocation6], %s174
        %s176 = sand.u32 %s56, 1
        %s177 = smul.addr %s176, 64
        %s178 = scalar_lea.vmem [#allocation5], %s177
        // Predicated region
        $region33: #{tpu_custom_call.1} parent=27 // pred_check
          %p179 = pneg %p69
        $region34: #{tpu_custom_call.1} parent=27 // pred_check_branch
          %181 = sbr.rel (%p179) target = $region36
        $region35: #{tpu_custom_call.1} parent=27 // pred_region
          %182 = dma.done %s175, 1024
        $region36: #{tpu_custom_call.1} parent=27 // pred_fallthru
          _
        %s183 = sand.u32 %s30, 1
        %s184 = scalar_lea.sflag [#allocation3], %s183
        %s185 = sand.u32 %s30, 1
        %s186 = smul.addr %s185, 64
        %s187 = scalar_lea.vmem [#allocation2], %s186
        %p188 = pneg %p43
        %p189 = pneg %p40
        %s190 = sand.u32 %s56, 1
        %s191 = scalar_lea.sflag [#allocation6], %s190
        %s192 = sand.u32 %s56, 1
        %s193 = smul.addr %s192, 64
        %s194 = scalar_lea.vmem [#allocation5], %s193
        %p195 = pneg %p69
        %p196 = pneg %p66
        %p197 = pneg %p95
        %p198 = pneg %p92
        %s199 = sand.u32 %s82, 1
        %s200 = scalar_lea.sflag [#allocation4], %s199
        %s201 = sand.u32 %s82, 1
        %s202 = smul.addr %s201, 64
        %s203 = scalar_lea.vmem [#allocation7], %s202
        %s204 = smul.u32 4, %s22
        %s205 = smul.u32 4, %s22
        %s206 = smul.u32 4, %s22
        %v207 = vld [vmem:[%s169] sm:$0xff]
        %v208 = vld [vmem:[%s169 + $0x8] sm:$0xff]
        %v209 = vld [vmem:[%s169 + $0x10] sm:$0xff]
        %v210 = vld [vmem:[%s169 + $0x18] sm:$0xff]
        %v211 = vld [vmem:[%s169 + $0x20] sm:$0xff]
        %v212 = vld [vmem:[%s169 + $0x28] sm:$0xff]
        %v213 = vld [vmem:[%s169 + $0x30] sm:$0xff]
        %v214 = vld [vmem:[%s169 + $0x38] sm:$0xff]
        %v215 = vld [vmem:[%s178] sm:$0xff]
        %v216 = vld [vmem:[%s178 + $0x8] sm:$0xff]
        %v217 = vld [vmem:[%s178 + $0x10] sm:$0xff]
        %v218 = vld [vmem:[%s178 + $0x18] sm:$0xff]
        %v219 = vld [vmem:[%s178 + $0x20] sm:$0xff]
        %v220 = vld [vmem:[%s178 + $0x28] sm:$0xff]
        %v221 = vld [vmem:[%s178 + $0x30] sm:$0xff]
        %v222 = vld [vmem:[%s178 + $0x38] sm:$0xff]
        %vm231 = vcmask 1046528
        %v232 = vrot.slane %v207, 1
        %v233 = vrot.slane %v208, 1
        %v234 = vsel %vm231, %v232, %v233
        %v235 = vrot.slane %v209, 1
        %v236 = vrot.slane %v210, 1
        %v237 = vsel %vm231, %v235, %v236
        %v238 = vrot.slane %v211, 1
        %v239 = vrot.slane %v212, 1
        %v240 = vsel %vm231, %v238, %v239
        %v241 = vrot.slane %v213, 1
        %v242 = vrot.slane %v214, 1
        %v243 = vsel %vm231, %v241, %v242
        %v252 = vadd.f32 %v207, %v234
        %v253 = vadd.f32 %v208, %v233
        %v254 = vadd.f32 %v209, %v237
        %v255 = vadd.f32 %v210, %v236
        %v256 = vadd.f32 %v211, %v240
        %v257 = vadd.f32 %v212, %v239
        %v258 = vadd.f32 %v213, %v243
        %v259 = vadd.f32 %v214, %v242
        %vm260 = vcmask 1045504
        %v261 = vrot.slane %v207, 2
        %v262 = vrot.slane %v208, 2
        %v263 = vsel %vm260, %v261, %v262
        %v264 = vrot.slane %v209, 2
        %v265 = vrot.slane %v210, 2
        %v266 = vsel %vm260, %v264, %v265
        %v267 = vrot.slane %v211, 2
        %v268 = vrot.slane %v212, 2
        %v269 = vsel %vm260, %v267, %v268
        %v270 = vrot.slane %v213, 2
        %v271 = vrot.slane %v214, 2
        %v272 = vsel %vm260, %v270, %v271
        %v281 = vadd.f32 %v252, %v263
        %v282 = vadd.f32 %v253, %v262
        %v283 = vadd.f32 %v254, %v266
        %v284 = vadd.f32 %v255, %v265
        %v285 = vadd.f32 %v256, %v269
        %v286 = vadd.f32 %v257, %v268
        %v287 = vadd.f32 %v258, %v272
        %v288 = vadd.f32 %v259, %v271
        %v289 = vmul.f32 %v207, 2.0
        %v290 = vmul.f32 %v209, 2.0
        %v291 = vmul.f32 %v211, 2.0
        %v292 = vmul.f32 %v213, 2.0
        %v297 = vrot.slane %v289, 1
        %v298 = vrot.slane %v290, 1
        %v299 = vrot.slane %v291, 1
        %v300 = vrot.slane %v292, 1
        %v305 = vadd.f32 %v207, %v297
        %v306 = vadd.f32 %v209, %v298
        %v307 = vadd.f32 %v211, %v299
        %v308 = vadd.f32 %v213, %v300
        %v309 = vmul.f32 %v208, 2.0
        %v310 = vmul.f32 %v210, 2.0
        %v311 = vmul.f32 %v212, 2.0
        %v312 = vmul.f32 %v214, 2.0
        %v317 = vrot.slane %v309, 7
        %v318 = vrot.slane %v310, 7
        %v319 = vrot.slane %v311, 7
        %v320 = vrot.slane %v312, 7
        %v325 = vadd.f32 %v208, %v317
        %v326 = vadd.f32 %v210, %v318
        %v327 = vadd.f32 %v212, %v319
        %v328 = vadd.f32 %v214, %v320
        %vm337 = vcmask 1040384
        %v338 = vrot.slane %v281, 7
        %v339 = vrot.slane %v282, 7
        %v340 = vsel %vm337, %v338, %v339
        %v341 = vrot.slane %v283, 7
        %v342 = vrot.slane %v284, 7
        %v343 = vsel %vm337, %v341, %v342
        %v344 = vrot.slane %v285, 7
        %v345 = vrot.slane %v286, 7
        %v346 = vsel %vm337, %v344, %v345
        %v347 = vrot.slane %v287, 7
        %v348 = vrot.slane %v288, 7
        %v349 = vsel %vm337, %v347, %v348
        %v358 = vsel %vm337, %v305, %v338
        %v359 = vsel %vm337, %v306, %v341
        %v360 = vsel %vm337, %v307, %v344
        %v361 = vsel %vm337, %v308, %v347
        %v362 = vsel %vm231, %v340, %v325
        %v363 = vsel %vm231, %v343, %v326
        %v364 = vsel %vm231, %v346, %v327
        %v365 = vsel %vm231, %v349, %v328
        %374 = vrot.lane.b32.xlu0 %v358, 127
        %v375 = vpop.permute.xlu0 %374
        %376 = vrot.lane.b32.xlu0 %v362, 127
        %v377 = vpop.permute.xlu0 %376
        %378 = vrot.lane.b32.xlu0 %v359, 127
        %v379 = vpop.permute.xlu0 %378
        %380 = vrot.lane.b32.xlu0 %v363, 127
        %v381 = vpop.permute.xlu0 %380
        %382 = vrot.lane.b32.xlu0 %v360, 127
        %v383 = vpop.permute.xlu0 %382
        %384 = vrot.lane.b32.xlu0 %v364, 127
        %v385 = vpop.permute.xlu0 %384
        %386 = vrot.lane.b32.xlu0 %v361, 127
        %v387 = vpop.permute.xlu0 %386
        %388 = vrot.lane.b32.xlu0 %v365, 127
        %v389 = vpop.permute.xlu0 %388
        %v398 = vadd.f32 %v358, %v375
        %v399 = vadd.f32 %v362, %v377
        %v400 = vadd.f32 %v359, %v379
        %v401 = vadd.f32 %v363, %v381
        %v402 = vadd.f32 %v360, %v383
        %v403 = vadd.f32 %v364, %v385
        %v404 = vadd.f32 %v361, %v387
        %v405 = vadd.f32 %v365, %v389
        %406 = vrot.lane.b32.xlu0 %v358, 126
        %v407 = vpop.permute.xlu0 %406
        %408 = vrot.lane.b32.xlu0 %v362, 126
        %v409 = vpop.permute.xlu0 %408
        %410 = vrot.lane.b32.xlu0 %v359, 126
        %v411 = vpop.permute.xlu0 %410
        %412 = vrot.lane.b32.xlu0 %v363, 126
        %v413 = vpop.permute.xlu0 %412
        %414 = vrot.lane.b32.xlu0 %v360, 126
        %v415 = vpop.permute.xlu0 %414
        %416 = vrot.lane.b32.xlu0 %v364, 126
        %v417 = vpop.permute.xlu0 %416
        %418 = vrot.lane.b32.xlu0 %v361, 126
        %v419 = vpop.permute.xlu0 %418
        %420 = vrot.lane.b32.xlu0 %v365, 126
        %v421 = vpop.permute.xlu0 %420
        %v430 = vadd.f32 %v398, %v407
        %v431 = vadd.f32 %v399, %v409
        %v432 = vadd.f32 %v400, %v411
        %v433 = vadd.f32 %v401, %v413
        %v434 = vadd.f32 %v402, %v415
        %v435 = vadd.f32 %v403, %v417
        %v436 = vadd.f32 %v404, %v419
        %v437 = vadd.f32 %v405, %v421
        %v438 = vmul.f32 %v358, 2.0
        %v439 = vmul.f32 %v362, 2.0
        %v440 = vmul.f32 %v359, 2.0
        %v441 = vmul.f32 %v363, 2.0
        %v442 = vmul.f32 %v360, 2.0
        %v443 = vmul.f32 %v364, 2.0
        %v444 = vmul.f32 %v361, 2.0
        %v445 = vmul.f32 %v365, 2.0
        %454 = vrot.lane.b32.xlu0 %v438, 127
        %v455 = vpop.permute.xlu0 %454
        %456 = vrot.lane.b32.xlu0 %v439, 127
        %v457 = vpop.permute.xlu0 %456
        %458 = vrot.lane.b32.xlu0 %v440, 127
        %v459 = vpop.permute.xlu0 %458
        %460 = vrot.lane.b32.xlu0 %v441, 127
        %v461 = vpop.permute.xlu0 %460
        %462 = vrot.lane.b32.xlu0 %v442, 127
        %v463 = vpop.permute.xlu0 %462
        %464 = vrot.lane.b32.xlu0 %v443, 127
        %v465 = vpop.permute.xlu0 %464
        %466 = vrot.lane.b32.xlu0 %v444, 127
        %v467 = vpop.permute.xlu0 %466
        %468 = vrot.lane.b32.xlu0 %v445, 127
        %v469 = vpop.permute.xlu0 %468
        %v478 = vadd.f32 %v358, %v455
        %v479 = vadd.f32 %v362, %v457
        %v480 = vadd.f32 %v359, %v459
        %v481 = vadd.f32 %v363, %v461
        %v482 = vadd.f32 %v360, %v463
        %v483 = vadd.f32 %v364, %v465
        %v484 = vadd.f32 %v361, %v467
        %v485 = vadd.f32 %v365, %v469
        %486 = vrot.lane.b32.xlu0 %v438, 1
        %v487 = vpop.permute.xlu0 %486
        %488 = vrot.lane.b32.xlu0 %v439, 1
        %v489 = vpop.permute.xlu0 %488
        %490 = vrot.lane.b32.xlu0 %v440, 1
        %v491 = vpop.permute.xlu0 %490
        %492 = vrot.lane.b32.xlu0 %v441, 1
        %v493 = vpop.permute.xlu0 %492
        %494 = vrot.lane.b32.xlu0 %v442, 1
        %v495 = vpop.permute.xlu0 %494
        %496 = vrot.lane.b32.xlu0 %v443, 1
        %v497 = vpop.permute.xlu0 %496
        %498 = vrot.lane.b32.xlu0 %v444, 1
        %v499 = vpop.permute.xlu0 %498
        %500 = vrot.lane.b32.xlu0 %v445, 1
        %v501 = vpop.permute.xlu0 %500
        %v510 = vadd.f32 %v358, %v487
        %v511 = vadd.f32 %v362, %v489
        %v512 = vadd.f32 %v359, %v491
        %v513 = vadd.f32 %v363, %v493
        %v514 = vadd.f32 %v360, %v495
        %v515 = vadd.f32 %v364, %v497
        %v516 = vadd.f32 %v361, %v499
        %v517 = vadd.f32 %v365, %v501
        %526 = vrot.lane.b32.xlu0 %v430, 1
        %v527 = vpop.permute.xlu0 %526
        %528 = vrot.lane.b32.xlu0 %v431, 1
        %v529 = vpop.permute.xlu0 %528
        %530 = vrot.lane.b32.xlu0 %v432, 1
        %v531 = vpop.permute.xlu0 %530
        %532 = vrot.lane.b32.xlu0 %v433, 1
        %v533 = vpop.permute.xlu0 %532
        %534 = vrot.lane.b32.xlu0 %v434, 1
        %v535 = vpop.permute.xlu0 %534
        %536 = vrot.lane.b32.xlu0 %v435, 1
        %v537 = vpop.permute.xlu0 %536
        %538 = vrot.lane.b32.xlu0 %v436, 1
        %v539 = vpop.permute.xlu0 %538
        %540 = vrot.lane.b32.xlu0 %v437, 1
        %v541 = vpop.permute.xlu0 %540
        %vm550 = vcmask 7168
        %v551 = vsel %vm550, %v478, %v527
        %v552 = vsel %vm550, %v479, %v529
        %v553 = vsel %vm550, %v480, %v531
        %v554 = vsel %vm550, %v481, %v533
        %v555 = vsel %vm550, %v482, %v535
        %v556 = vsel %vm550, %v483, %v537
        %v557 = vsel %vm550, %v484, %v539
        %v558 = vsel %vm550, %v485, %v541
        %vm559 = vcmask 121856
        %v560 = vsel %vm559, %v551, %v510
        %v561 = vsel %vm559, %v552, %v511
        %v562 = vsel %vm559, %v553, %v512
        %v563 = vsel %vm559, %v554, %v513
        %v564 = vsel %vm559, %v555, %v514
        %v565 = vsel %vm559, %v556, %v515
        %v566 = vsel %vm559, %v557, %v516
        %v567 = vsel %vm559, %v558, %v517
        %v576 = vrot.slane %v215, 1
        %v577 = vrot.slane %v216, 1
        %v578 = vsel %vm231, %v576, %v577
        %v579 = vrot.slane %v217, 1
        %v580 = vrot.slane %v218, 1
        %v581 = vsel %vm231, %v579, %v580
        %v582 = vrot.slane %v219, 1
        %v583 = vrot.slane %v220, 1
        %v584 = vsel %vm231, %v582, %v583
        %v585 = vrot.slane %v221, 1
        %v586 = vrot.slane %v222, 1
        %v587 = vsel %vm231, %v585, %v586
        %v596 = vadd.f32 %v215, %v578
        %v597 = vadd.f32 %v216, %v577
        %v598 = vadd.f32 %v217, %v581
        %v599 = vadd.f32 %v218, %v580
        %v600 = vadd.f32 %v219, %v584
        %v601 = vadd.f32 %v220, %v583
        %v602 = vadd.f32 %v221, %v587
        %v603 = vadd.f32 %v222, %v586
        %v604 = vrot.slane %v215, 2
        %v605 = vrot.slane %v216, 2
        %v606 = vsel %vm260, %v604, %v605
        %v607 = vrot.slane %v217, 2
        %v608 = vrot.slane %v218, 2
        %v609 = vsel %vm260, %v607, %v608
        %v610 = vrot.slane %v219, 2
        %v611 = vrot.slane %v220, 2
        %v612 = vsel %vm260, %v610, %v611
        %v613 = vrot.slane %v221, 2
        %v614 = vrot.slane %v222, 2
        %v615 = vsel %vm260, %v613, %v614
        %v624 = vadd.f32 %v596, %v606
        %v625 = vadd.f32 %v597, %v605
        %v626 = vadd.f32 %v598, %v609
        %v627 = vadd.f32 %v599, %v608
        %v628 = vadd.f32 %v600, %v612
        %v629 = vadd.f32 %v601, %v611
        %v630 = vadd.f32 %v602, %v615
        %v631 = vadd.f32 %v603, %v614
        %v632 = vmul.f32 %v215, 2.0
        %v633 = vmul.f32 %v217, 2.0
        %v634 = vmul.f32 %v219, 2.0
        %v635 = vmul.f32 %v221, 2.0
        %v640 = vrot.slane %v632, 1
        %v641 = vrot.slane %v633, 1
        %v642 = vrot.slane %v634, 1
        %v643 = vrot.slane %v635, 1
        %v648 = vadd.f32 %v215, %v640
        %v649 = vadd.f32 %v217, %v641
        %v650 = vadd.f32 %v219, %v642
        %v651 = vadd.f32 %v221, %v643
        %v652 = vmul.f32 %v216, 2.0
        %v653 = vmul.f32 %v218, 2.0
        %v654 = vmul.f32 %v220, 2.0
        %v655 = vmul.f32 %v222, 2.0
        %v660 = vrot.slane %v652, 7
        %v661 = vrot.slane %v653, 7
        %v662 = vrot.slane %v654, 7
        %v663 = vrot.slane %v655, 7
        %v668 = vadd.f32 %v216, %v660
        %v669 = vadd.f32 %v218, %v661
        %v670 = vadd.f32 %v220, %v662
        %v671 = vadd.f32 %v222, %v663
        %v680 = vrot.slane %v624, 7
        %v681 = vrot.slane %v625, 7
        %v682 = vsel %vm337, %v680, %v681
        %v683 = vrot.slane %v626, 7
        %v684 = vrot.slane %v627, 7
        %v685 = vsel %vm337, %v683, %v684
        %v686 = vrot.slane %v628, 7
        %v687 = vrot.slane %v629, 7
        %v688 = vsel %vm337, %v686, %v687
        %v689 = vrot.slane %v630, 7
        %v690 = vrot.slane %v631, 7
        %v691 = vsel %vm337, %v689, %v690
        %v700 = vsel %vm337, %v648, %v680
        %v701 = vsel %vm337, %v649, %v683
        %v702 = vsel %vm337, %v650, %v686
        %v703 = vsel %vm337, %v651, %v689
        %v704 = vsel %vm231, %v682, %v668
        %v705 = vsel %vm231, %v685, %v669
        %v706 = vsel %vm231, %v688, %v670
        %v707 = vsel %vm231, %v691, %v671
        %716 = vrot.lane.b32.xlu0 %v700, 127
        %v717 = vpop.permute.xlu0 %716
        %718 = vrot.lane.b32.xlu0 %v704, 127
        %v719 = vpop.permute.xlu0 %718
        %720 = vrot.lane.b32.xlu0 %v701, 127
        %v721 = vpop.permute.xlu0 %720
        %722 = vrot.lane.b32.xlu0 %v705, 127
        %v723 = vpop.permute.xlu0 %722
        %724 = vrot.lane.b32.xlu0 %v702, 127
        %v725 = vpop.permute.xlu0 %724
        %726 = vrot.lane.b32.xlu0 %v706, 127
        %v727 = vpop.permute.xlu0 %726
        %728 = vrot.lane.b32.xlu0 %v703, 127
        %v729 = vpop.permute.xlu0 %728
        %730 = vrot.lane.b32.xlu0 %v707, 127
        %v731 = vpop.permute.xlu0 %730
        %v740 = vadd.f32 %v700, %v717
        %v741 = vadd.f32 %v704, %v719
        %v742 = vadd.f32 %v701, %v721
        %v743 = vadd.f32 %v705, %v723
        %v744 = vadd.f32 %v702, %v725
        %v745 = vadd.f32 %v706, %v727
        %v746 = vadd.f32 %v703, %v729
        %v747 = vadd.f32 %v707, %v731
        %748 = vrot.lane.b32.xlu0 %v700, 126
        %v749 = vpop.permute.xlu0 %748
        %750 = vrot.lane.b32.xlu0 %v704, 126
        %v751 = vpop.permute.xlu0 %750
        %752 = vrot.lane.b32.xlu0 %v701, 126
        %v753 = vpop.permute.xlu0 %752
        %754 = vrot.lane.b32.xlu0 %v705, 126
        %v755 = vpop.permute.xlu0 %754
        %756 = vrot.lane.b32.xlu0 %v702, 126
        %v757 = vpop.permute.xlu0 %756
        %758 = vrot.lane.b32.xlu0 %v706, 126
        %v759 = vpop.permute.xlu0 %758
        %760 = vrot.lane.b32.xlu0 %v703, 126
        %v761 = vpop.permute.xlu0 %760
        %762 = vrot.lane.b32.xlu0 %v707, 126
        %v763 = vpop.permute.xlu0 %762
        %v772 = vadd.f32 %v740, %v749
        %v773 = vadd.f32 %v741, %v751
        %v774 = vadd.f32 %v742, %v753
        %v775 = vadd.f32 %v743, %v755
        %v776 = vadd.f32 %v744, %v757
        %v777 = vadd.f32 %v745, %v759
        %v778 = vadd.f32 %v746, %v761
        %v779 = vadd.f32 %v747, %v763
        %v780 = vmul.f32 %v700, 2.0
        %v781 = vmul.f32 %v704, 2.0
        %v782 = vmul.f32 %v701, 2.0
        %v783 = vmul.f32 %v705, 2.0
        %v784 = vmul.f32 %v702, 2.0
        %v785 = vmul.f32 %v706, 2.0
        %v786 = vmul.f32 %v703, 2.0
        %v787 = vmul.f32 %v707, 2.0
        %796 = vrot.lane.b32.xlu0 %v780, 127
        %v797 = vpop.permute.xlu0 %796
        %798 = vrot.lane.b32.xlu0 %v781, 127
        %v799 = vpop.permute.xlu0 %798
        %800 = vrot.lane.b32.xlu0 %v782, 127
        %v801 = vpop.permute.xlu0 %800
        %802 = vrot.lane.b32.xlu0 %v783, 127
        %v803 = vpop.permute.xlu0 %802
        %804 = vrot.lane.b32.xlu0 %v784, 127
        %v805 = vpop.permute.xlu0 %804
        %806 = vrot.lane.b32.xlu0 %v785, 127
        %v807 = vpop.permute.xlu0 %806
        %808 = vrot.lane.b32.xlu0 %v786, 127
        %v809 = vpop.permute.xlu0 %808
        %810 = vrot.lane.b32.xlu0 %v787, 127
        %v811 = vpop.permute.xlu0 %810
        %v820 = vadd.f32 %v700, %v797
        %v821 = vadd.f32 %v704, %v799
        %v822 = vadd.f32 %v701, %v801
        %v823 = vadd.f32 %v705, %v803
        %v824 = vadd.f32 %v702, %v805
        %v825 = vadd.f32 %v706, %v807
        %v826 = vadd.f32 %v703, %v809
        %v827 = vadd.f32 %v707, %v811
        %828 = vrot.lane.b32.xlu0 %v780, 1
        %v829 = vpop.permute.xlu0 %828
        %830 = vrot.lane.b32.xlu0 %v781, 1
        %v831 = vpop.permute.xlu0 %830
        %832 = vrot.lane.b32.xlu0 %v782, 1
        %v833 = vpop.permute.xlu0 %832
        %834 = vrot.lane.b32.xlu0 %v783, 1
        %v835 = vpop.permute.xlu0 %834
        %836 = vrot.lane.b32.xlu0 %v784, 1
        %v837 = vpop.permute.xlu0 %836
        %838 = vrot.lane.b32.xlu0 %v785, 1
        %v839 = vpop.permute.xlu0 %838
        %840 = vrot.lane.b32.xlu0 %v786, 1
        %v841 = vpop.permute.xlu0 %840
        %842 = vrot.lane.b32.xlu0 %v787, 1
        %v843 = vpop.permute.xlu0 %842
        %v852 = vadd.f32 %v700, %v829
        %v853 = vadd.f32 %v704, %v831
        %v854 = vadd.f32 %v701, %v833
        %v855 = vadd.f32 %v705, %v835
        %v856 = vadd.f32 %v702, %v837
        %v857 = vadd.f32 %v706, %v839
        %v858 = vadd.f32 %v703, %v841
        %v859 = vadd.f32 %v707, %v843
        %868 = vrot.lane.b32.xlu0 %v772, 1
        %v869 = vpop.permute.xlu0 %868
        %870 = vrot.lane.b32.xlu0 %v773, 1
        %v871 = vpop.permute.xlu0 %870
        %872 = vrot.lane.b32.xlu0 %v774, 1
        %v873 = vpop.permute.xlu0 %872
        %874 = vrot.lane.b32.xlu0 %v775, 1
        %v875 = vpop.permute.xlu0 %874
        %876 = vrot.lane.b32.xlu0 %v776, 1
        %v877 = vpop.permute.xlu0 %876
        %878 = vrot.lane.b32.xlu0 %v777, 1
        %v879 = vpop.permute.xlu0 %878
        %880 = vrot.lane.b32.xlu0 %v778, 1
        %v881 = vpop.permute.xlu0 %880
        %882 = vrot.lane.b32.xlu0 %v779, 1
        %v883 = vpop.permute.xlu0 %882
        %v892 = vsel %vm550, %v820, %v869
        %v893 = vsel %vm550, %v821, %v871
        %v894 = vsel %vm550, %v822, %v873
        %v895 = vsel %vm550, %v823, %v875
        %v896 = vsel %vm550, %v824, %v877
        %v897 = vsel %vm550, %v825, %v879
        %v898 = vsel %vm550, %v826, %v881
        %v899 = vsel %vm550, %v827, %v883
        %v900 = vsel %vm559, %v892, %v852
        %v901 = vsel %vm559, %v893, %v853
        %v902 = vsel %vm559, %v894, %v854
        %v903 = vsel %vm559, %v895, %v855
        %v904 = vsel %vm559, %v896, %v856
        %v905 = vsel %vm559, %v897, %v857
        %v906 = vsel %vm559, %v898, %v858
        %v907 = vsel %vm559, %v899, %v859
        %v908 = vmul.f32 %v207, %v207
        %v909 = vmul.f32 %v208, %v208
        %v910 = vmul.f32 %v209, %v209
        %v911 = vmul.f32 %v210, %v210
        %v912 = vmul.f32 %v211, %v211
        %v913 = vmul.f32 %v212, %v212
        %v914 = vmul.f32 %v213, %v213
        %v915 = vmul.f32 %v214, %v214
        %v924 = vrot.slane %v908, 1
        %v925 = vrot.slane %v909, 1
        %v926 = vsel %vm231, %v924, %v925
        %v927 = vrot.slane %v910, 1
        %v928 = vrot.slane %v911, 1
        %v929 = vsel %vm231, %v927, %v928
        %v930 = vrot.slane %v912, 1
        %v931 = vrot.slane %v913, 1
        %v932 = vsel %vm231, %v930, %v931
        %v933 = vrot.slane %v914, 1
        %v934 = vrot.slane %v915, 1
        %v935 = vsel %vm231, %v933, %v934
        %v944 = vadd.f32 %v908, %v926
        %v945 = vadd.f32 %v909, %v925
        %v946 = vadd.f32 %v910, %v929
        %v947 = vadd.f32 %v911, %v928
        %v948 = vadd.f32 %v912, %v932
        %v949 = vadd.f32 %v913, %v931
        %v950 = vadd.f32 %v914, %v935
        %v951 = vadd.f32 %v915, %v934
        %v952 = vrot.slane %v908, 2
        %v953 = vrot.slane %v909, 2
        %v954 = vsel %vm260, %v952, %v953
        %v955 = vrot.slane %v910, 2
        %v956 = vrot.slane %v911, 2
        %v957 = vsel %vm260, %v955, %v956
        %v958 = vrot.slane %v912, 2
        %v959 = vrot.slane %v913, 2
        %v960 = vsel %vm260, %v958, %v959
        %v961 = vrot.slane %v914, 2
        %v962 = vrot.slane %v915, 2
        %v963 = vsel %vm260, %v961, %v962
        %v972 = vadd.f32 %v944, %v954
        %v973 = vadd.f32 %v945, %v953
        %v974 = vadd.f32 %v946, %v957
        %v975 = vadd.f32 %v947, %v956
        %v976 = vadd.f32 %v948, %v960
        %v977 = vadd.f32 %v949, %v959
        %v978 = vadd.f32 %v950, %v963
        %v979 = vadd.f32 %v951, %v962
        %v980 = vmul.f32 %v908, 2.0
        %v981 = vmul.f32 %v910, 2.0
        %v982 = vmul.f32 %v912, 2.0
        %v983 = vmul.f32 %v914, 2.0
        %v988 = vrot.slane %v980, 1
        %v989 = vrot.slane %v981, 1
        %v990 = vrot.slane %v982, 1
        %v991 = vrot.slane %v983, 1
        %v996 = vadd.f32 %v908, %v988
        %v997 = vadd.f32 %v910, %v989
        %v998 = vadd.f32 %v912, %v990
        %v999 = vadd.f32 %v914, %v991
        %v1000 = vmul.f32 %v909, 2.0
        %v1001 = vmul.f32 %v911, 2.0
        %v1002 = vmul.f32 %v913, 2.0
        %v1003 = vmul.f32 %v915, 2.0
        %v1008 = vrot.slane %v1000, 7
        %v1009 = vrot.slane %v1001, 7
        %v1010 = vrot.slane %v1002, 7
        %v1011 = vrot.slane %v1003, 7
        %v1016 = vadd.f32 %v909, %v1008
        %v1017 = vadd.f32 %v911, %v1009
        %v1018 = vadd.f32 %v913, %v1010
        %v1019 = vadd.f32 %v915, %v1011
        %v1028 = vrot.slane %v972, 7
        %v1029 = vrot.slane %v973, 7
        %v1030 = vsel %vm337, %v1028, %v1029
        %v1031 = vrot.slane %v974, 7
        %v1032 = vrot.slane %v975, 7
        %v1033 = vsel %vm337, %v1031, %v1032
        %v1034 = vrot.slane %v976, 7
        %v1035 = vrot.slane %v977, 7
        %v1036 = vsel %vm337, %v1034, %v1035
        %v1037 = vrot.slane %v978, 7
        %v1038 = vrot.slane %v979, 7
        %v1039 = vsel %vm337, %v1037, %v1038
        %v1048 = vsel %vm337, %v996, %v1028
        %v1049 = vsel %vm337, %v997, %v1031
        %v1050 = vsel %vm337, %v998, %v1034
        %v1051 = vsel %vm337, %v999, %v1037
        %v1052 = vsel %vm231, %v1030, %v1016
        %v1053 = vsel %vm231, %v1033, %v1017
        %v1054 = vsel %vm231, %v1036, %v1018
        %v1055 = vsel %vm231, %v1039, %v1019
        %1064 = vrot.lane.b32.xlu0 %v1048, 127
        %v1065 = vpop.permute.xlu0 %1064
        %1066 = vrot.lane.b32.xlu0 %v1052, 127
        %v1067 = vpop.permute.xlu0 %1066
        %1068 = vrot.lane.b32.xlu0 %v1049, 127
        %v1069 = vpop.permute.xlu0 %1068
        %1070 = vrot.lane.b32.xlu0 %v1053, 127
        %v1071 = vpop.permute.xlu0 %1070
        %1072 = vrot.lane.b32.xlu0 %v1050, 127
        %v1073 = vpop.permute.xlu0 %1072
        %1074 = vrot.lane.b32.xlu0 %v1054, 127
        %v1075 = vpop.permute.xlu0 %1074
        %1076 = vrot.lane.b32.xlu0 %v1051, 127
        %v1077 = vpop.permute.xlu0 %1076
        %1078 = vrot.lane.b32.xlu0 %v1055, 127
        %v1079 = vpop.permute.xlu0 %1078
        %v1088 = vadd.f32 %v1048, %v1065
        %v1089 = vadd.f32 %v1052, %v1067
        %v1090 = vadd.f32 %v1049, %v1069
        %v1091 = vadd.f32 %v1053, %v1071
        %v1092 = vadd.f32 %v1050, %v1073
        %v1093 = vadd.f32 %v1054, %v1075
        %v1094 = vadd.f32 %v1051, %v1077
        %v1095 = vadd.f32 %v1055, %v1079
        %1096 = vrot.lane.b32.xlu0 %v1048, 126
        %v1097 = vpop.permute.xlu0 %1096
        %1098 = vrot.lane.b32.xlu0 %v1052, 126
        %v1099 = vpop.permute.xlu0 %1098
        %1100 = vrot.lane.b32.xlu0 %v1049, 126
        %v1101 = vpop.permute.xlu0 %1100
        %1102 = vrot.lane.b32.xlu0 %v1053, 126
        %v1103 = vpop.permute.xlu0 %1102
        %1104 = vrot.lane.b32.xlu0 %v1050, 126
        %v1105 = vpop.permute.xlu0 %1104
        %1106 = vrot.lane.b32.xlu0 %v1054, 126
        %v1107 = vpop.permute.xlu0 %1106
        %1108 = vrot.lane.b32.xlu0 %v1051, 126
        %v1109 = vpop.permute.xlu0 %1108
        %1110 = vrot.lane.b32.xlu0 %v1055, 126
        %v1111 = vpop.permute.xlu0 %1110
        %v1120 = vadd.f32 %v1088, %v1097
        %v1121 = vadd.f32 %v1089, %v1099
        %v1122 = vadd.f32 %v1090, %v1101
        %v1123 = vadd.f32 %v1091, %v1103
        %v1124 = vadd.f32 %v1092, %v1105
        %v1125 = vadd.f32 %v1093, %v1107
        %v1126 = vadd.f32 %v1094, %v1109
        %v1127 = vadd.f32 %v1095, %v1111
        %v1128 = vmul.f32 %v1048, 2.0
        %v1129 = vmul.f32 %v1052, 2.0
        %v1130 = vmul.f32 %v1049, 2.0
        %v1131 = vmul.f32 %v1053, 2.0
        %v1132 = vmul.f32 %v1050, 2.0
        %v1133 = vmul.f32 %v1054, 2.0
        %v1134 = vmul.f32 %v1051, 2.0
        %v1135 = vmul.f32 %v1055, 2.0
        %1144 = vrot.lane.b32.xlu0 %v1128, 127
        %v1145 = vpop.permute.xlu0 %1144
        %1146 = vrot.lane.b32.xlu0 %v1129, 127
        %v1147 = vpop.permute.xlu0 %1146
        %1148 = vrot.lane.b32.xlu0 %v1130, 127
        %v1149 = vpop.permute.xlu0 %1148
        %1150 = vrot.lane.b32.xlu0 %v1131, 127
        %v1151 = vpop.permute.xlu0 %1150
        %1152 = vrot.lane.b32.xlu0 %v1132, 127
        %v1153 = vpop.permute.xlu0 %1152
        %1154 = vrot.lane.b32.xlu0 %v1133, 127
        %v1155 = vpop.permute.xlu0 %1154
        %1156 = vrot.lane.b32.xlu0 %v1134, 127
        %v1157 = vpop.permute.xlu0 %1156
        %1158 = vrot.lane.b32.xlu0 %v1135, 127
        %v1159 = vpop.permute.xlu0 %1158
        %v1168 = vadd.f32 %v1048, %v1145
        %v1169 = vadd.f32 %v1052, %v1147
        %v1170 = vadd.f32 %v1049, %v1149
        %v1171 = vadd.f32 %v1053, %v1151
        %v1172 = vadd.f32 %v1050, %v1153
        %v1173 = vadd.f32 %v1054, %v1155
        %v1174 = vadd.f32 %v1051, %v1157
        %v1175 = vadd.f32 %v1055, %v1159
        %1176 = vrot.lane.b32.xlu0 %v1128, 1
        %v1177 = vpop.permute.xlu0 %1176
        %1178 = vrot.lane.b32.xlu0 %v1129, 1
        %v1179 = vpop.permute.xlu0 %1178
        %1180 = vrot.lane.b32.xlu0 %v1130, 1
        %v1181 = vpop.permute.xlu0 %1180
        %1182 = vrot.lane.b32.xlu0 %v1131, 1
        %v1183 = vpop.permute.xlu0 %1182
        %1184 = vrot.lane.b32.xlu0 %v1132, 1
        %v1185 = vpop.permute.xlu0 %1184
        %1186 = vrot.lane.b32.xlu0 %v1133, 1
        %v1187 = vpop.permute.xlu0 %1186
        %1188 = vrot.lane.b32.xlu0 %v1134, 1
        %v1189 = vpop.permute.xlu0 %1188
        %1190 = vrot.lane.b32.xlu0 %v1135, 1
        %v1191 = vpop.permute.xlu0 %1190
        %v1200 = vadd.f32 %v1048, %v1177
        %v1201 = vadd.f32 %v1052, %v1179
        %v1202 = vadd.f32 %v1049, %v1181
        %v1203 = vadd.f32 %v1053, %v1183
        %v1204 = vadd.f32 %v1050, %v1185
        %v1205 = vadd.f32 %v1054, %v1187
        %v1206 = vadd.f32 %v1051, %v1189
        %v1207 = vadd.f32 %v1055, %v1191
        %1216 = vrot.lane.b32.xlu0 %v1120, 1
        %v1217 = vpop.permute.xlu0 %1216
        %1218 = vrot.lane.b32.xlu0 %v1121, 1
        %v1219 = vpop.permute.xlu0 %1218
        %1220 = vrot.lane.b32.xlu0 %v1122, 1
        %v1221 = vpop.permute.xlu0 %1220
        %1222 = vrot.lane.b32.xlu0 %v1123, 1
        %v1223 = vpop.permute.xlu0 %1222
        %1224 = vrot.lane.b32.xlu0 %v1124, 1
        %v1225 = vpop.permute.xlu0 %1224
        %1226 = vrot.lane.b32.xlu0 %v1125, 1
        %v1227 = vpop.permute.xlu0 %1226
        %1228 = vrot.lane.b32.xlu0 %v1126, 1
        %v1229 = vpop.permute.xlu0 %1228
        %1230 = vrot.lane.b32.xlu0 %v1127, 1
        %v1231 = vpop.permute.xlu0 %1230
        %v1240 = vsel %vm550, %v1168, %v1217
        %v1241 = vsel %vm550, %v1169, %v1219
        %v1242 = vsel %vm550, %v1170, %v1221
        %v1243 = vsel %vm550, %v1171, %v1223
        %v1244 = vsel %vm550, %v1172, %v1225
        %v1245 = vsel %vm550, %v1173, %v1227
        %v1246 = vsel %vm550, %v1174, %v1229
        %v1247 = vsel %vm550, %v1175, %v1231
        %v1248 = vsel %vm559, %v1240, %v1200
        %v1249 = vsel %vm559, %v1241, %v1201
        %v1250 = vsel %vm559, %v1242, %v1202
        %v1251 = vsel %vm559, %v1243, %v1203
        %v1252 = vsel %vm559, %v1244, %v1204
        %v1253 = vsel %vm559, %v1245, %v1205
        %v1254 = vsel %vm559, %v1246, %v1206
        %v1255 = vsel %vm559, %v1247, %v1207
        %v1256 = vmul.f32 %v215, %v215
        %v1257 = vmul.f32 %v216, %v216
        %v1258 = vmul.f32 %v217, %v217
        %v1259 = vmul.f32 %v218, %v218
        %v1260 = vmul.f32 %v219, %v219
        %v1261 = vmul.f32 %v220, %v220
        %v1262 = vmul.f32 %v221, %v221
        %v1263 = vmul.f32 %v222, %v222
        %v1272 = vrot.slane %v1256, 1
        %v1273 = vrot.slane %v1257, 1
        %v1274 = vsel %vm231, %v1272, %v1273
        %v1275 = vrot.slane %v1258, 1
        %v1276 = vrot.slane %v1259, 1
        %v1277 = vsel %vm231, %v1275, %v1276
        %v1278 = vrot.slane %v1260, 1
        %v1279 = vrot.slane %v1261, 1
        %v1280 = vsel %vm231, %v1278, %v1279
        %v1281 = vrot.slane %v1262, 1
        %v1282 = vrot.slane %v1263, 1
        %v1283 = vsel %vm231, %v1281, %v1282
        %v1292 = vadd.f32 %v1256, %v1274
        %v1293 = vadd.f32 %v1257, %v1273
        %v1294 = vadd.f32 %v1258, %v1277
        %v1295 = vadd.f32 %v1259, %v1276
        %v1296 = vadd.f32 %v1260, %v1280
        %v1297 = vadd.f32 %v1261, %v1279
        %v1298 = vadd.f32 %v1262, %v1283
        %v1299 = vadd.f32 %v1263, %v1282
        %v1300 = vrot.slane %v1256, 2
        %v1301 = vrot.slane %v1257, 2
        %v1302 = vsel %vm260, %v1300, %v1301
        %v1303 = vrot.slane %v1258, 2
        %v1304 = vrot.slane %v1259, 2
        %v1305 = vsel %vm260, %v1303, %v1304
        %v1306 = vrot.slane %v1260, 2
        %v1307 = vrot.slane %v1261, 2
        %v1308 = vsel %vm260, %v1306, %v1307
        %v1309 = vrot.slane %v1262, 2
        %v1310 = vrot.slane %v1263, 2
        %v1311 = vsel %vm260, %v1309, %v1310
        %v1320 = vadd.f32 %v1292, %v1302
        %v1321 = vadd.f32 %v1293, %v1301
        %v1322 = vadd.f32 %v1294, %v1305
        %v1323 = vadd.f32 %v1295, %v1304
        %v1324 = vadd.f32 %v1296, %v1308
        %v1325 = vadd.f32 %v1297, %v1307
        %v1326 = vadd.f32 %v1298, %v1311
        %v1327 = vadd.f32 %v1299, %v1310
        %v1328 = vmul.f32 %v1256, 2.0
        %v1329 = vmul.f32 %v1258, 2.0
        %v1330 = vmul.f32 %v1260, 2.0
        %v1331 = vmul.f32 %v1262, 2.0
        %v1336 = vrot.slane %v1328, 1
        %v1337 = vrot.slane %v1329, 1
        %v1338 = vrot.slane %v1330, 1
        %v1339 = vrot.slane %v1331, 1
        %v1344 = vadd.f32 %v1256, %v1336
        %v1345 = vadd.f32 %v1258, %v1337
        %v1346 = vadd.f32 %v1260, %v1338
        %v1347 = vadd.f32 %v1262, %v1339
        %v1348 = vmul.f32 %v1257, 2.0
        %v1349 = vmul.f32 %v1259, 2.0
        %v1350 = vmul.f32 %v1261, 2.0
        %v1351 = vmul.f32 %v1263, 2.0
        %v1356 = vrot.slane %v1348, 7
        %v1357 = vrot.slane %v1349, 7
        %v1358 = vrot.slane %v1350, 7
        %v1359 = vrot.slane %v1351, 7
        %v1364 = vadd.f32 %v1257, %v1356
        %v1365 = vadd.f32 %v1259, %v1357
        %v1366 = vadd.f32 %v1261, %v1358
        %v1367 = vadd.f32 %v1263, %v1359
        %v1376 = vrot.slane %v1320, 7
        %v1377 = vrot.slane %v1321, 7
        %v1378 = vsel %vm337, %v1376, %v1377
        %v1379 = vrot.slane %v1322, 7
        %v1380 = vrot.slane %v1323, 7
        %v1381 = vsel %vm337, %v1379, %v1380
        %v1382 = vrot.slane %v1324, 7
        %v1383 = vrot.slane %v1325, 7
        %v1384 = vsel %vm337, %v1382, %v1383
        %v1385 = vrot.slane %v1326, 7
        %v1386 = vrot.slane %v1327, 7
        %v1387 = vsel %vm337, %v1385, %v1386
        %v1396 = vsel %vm337, %v1344, %v1376
        %v1397 = vsel %vm337, %v1345, %v1379
        %v1398 = vsel %vm337, %v1346, %v1382
        %v1399 = vsel %vm337, %v1347, %v1385
        %v1400 = vsel %vm231, %v1378, %v1364
        %v1401 = vsel %vm231, %v1381, %v1365
        %v1402 = vsel %vm231, %v1384, %v1366
        %v1403 = vsel %vm231, %v1387, %v1367
        %1412 = vrot.lane.b32.xlu0 %v1396, 127
        %v1413 = vpop.permute.xlu0 %1412
        %1414 = vrot.lane.b32.xlu0 %v1400, 127
        %v1415 = vpop.permute.xlu0 %1414
        %1416 = vrot.lane.b32.xlu0 %v1397, 127
        %v1417 = vpop.permute.xlu0 %1416
        %1418 = vrot.lane.b32.xlu0 %v1401, 127
        %v1419 = vpop.permute.xlu0 %1418
        %1420 = vrot.lane.b32.xlu0 %v1398, 127
        %v1421 = vpop.permute.xlu0 %1420
        %1422 = vrot.lane.b32.xlu0 %v1402, 127
        %v1423 = vpop.permute.xlu0 %1422
        %1424 = vrot.lane.b32.xlu0 %v1399, 127
        %v1425 = vpop.permute.xlu0 %1424
        %1426 = vrot.lane.b32.xlu0 %v1403, 127
        %v1427 = vpop.permute.xlu0 %1426
        %v1436 = vadd.f32 %v1396, %v1413
        %v1437 = vadd.f32 %v1400, %v1415
        %v1438 = vadd.f32 %v1397, %v1417
        %v1439 = vadd.f32 %v1401, %v1419
        %v1440 = vadd.f32 %v1398, %v1421
        %v1441 = vadd.f32 %v1402, %v1423
        %v1442 = vadd.f32 %v1399, %v1425
        %v1443 = vadd.f32 %v1403, %v1427
        %1444 = vrot.lane.b32.xlu0 %v1396, 126
        %v1445 = vpop.permute.xlu0 %1444
        %1446 = vrot.lane.b32.xlu0 %v1400, 126
        %v1447 = vpop.permute.xlu0 %1446
        %1448 = vrot.lane.b32.xlu0 %v1397, 126
        %v1449 = vpop.permute.xlu0 %1448
        %1450 = vrot.lane.b32.xlu0 %v1401, 126
        %v1451 = vpop.permute.xlu0 %1450
        %1452 = vrot.lane.b32.xlu0 %v1398, 126
        %v1453 = vpop.permute.xlu0 %1452
        %1454 = vrot.lane.b32.xlu0 %v1402, 126
        %v1455 = vpop.permute.xlu0 %1454
        %1456 = vrot.lane.b32.xlu0 %v1399, 126
        %v1457 = vpop.permute.xlu0 %1456
        %1458 = vrot.lane.b32.xlu0 %v1403, 126
        %v1459 = vpop.permute.xlu0 %1458
        %v1468 = vadd.f32 %v1436, %v1445
        %v1469 = vadd.f32 %v1437, %v1447
        %v1470 = vadd.f32 %v1438, %v1449
        %v1471 = vadd.f32 %v1439, %v1451
        %v1472 = vadd.f32 %v1440, %v1453
        %v1473 = vadd.f32 %v1441, %v1455
        %v1474 = vadd.f32 %v1442, %v1457
        %v1475 = vadd.f32 %v1443, %v1459
        %v1476 = vmul.f32 %v1396, 2.0
        %v1477 = vmul.f32 %v1400, 2.0
        %v1478 = vmul.f32 %v1397, 2.0
        %v1479 = vmul.f32 %v1401, 2.0
        %v1480 = vmul.f32 %v1398, 2.0
        %v1481 = vmul.f32 %v1402, 2.0
        %v1482 = vmul.f32 %v1399, 2.0
        %v1483 = vmul.f32 %v1403, 2.0
        %1492 = vrot.lane.b32.xlu0 %v1476, 127
        %v1493 = vpop.permute.xlu0 %1492
        %1494 = vrot.lane.b32.xlu0 %v1477, 127
        %v1495 = vpop.permute.xlu0 %1494
        %1496 = vrot.lane.b32.xlu0 %v1478, 127
        %v1497 = vpop.permute.xlu0 %1496
        %1498 = vrot.lane.b32.xlu0 %v1479, 127
        %v1499 = vpop.permute.xlu0 %1498
        %1500 = vrot.lane.b32.xlu0 %v1480, 127
        %v1501 = vpop.permute.xlu0 %1500
        %1502 = vrot.lane.b32.xlu0 %v1481, 127
        %v1503 = vpop.permute.xlu0 %1502
        %1504 = vrot.lane.b32.xlu0 %v1482, 127
        %v1505 = vpop.permute.xlu0 %1504
        %1506 = vrot.lane.b32.xlu0 %v1483, 127
        %v1507 = vpop.permute.xlu0 %1506
        %v1516 = vadd.f32 %v1396, %v1493
        %v1517 = vadd.f32 %v1400, %v1495
        %v1518 = vadd.f32 %v1397, %v1497
        %v1519 = vadd.f32 %v1401, %v1499
        %v1520 = vadd.f32 %v1398, %v1501
        %v1521 = vadd.f32 %v1402, %v1503
        %v1522 = vadd.f32 %v1399, %v1505
        %v1523 = vadd.f32 %v1403, %v1507
        %1524 = vrot.lane.b32.xlu0 %v1476, 1
        %v1525 = vpop.permute.xlu0 %1524
        %1526 = vrot.lane.b32.xlu0 %v1477, 1
        %v1527 = vpop.permute.xlu0 %1526
        %1528 = vrot.lane.b32.xlu0 %v1478, 1
        %v1529 = vpop.permute.xlu0 %1528
        %1530 = vrot.lane.b32.xlu0 %v1479, 1
        %v1531 = vpop.permute.xlu0 %1530
        %1532 = vrot.lane.b32.xlu0 %v1480, 1
        %v1533 = vpop.permute.xlu0 %1532
        %1534 = vrot.lane.b32.xlu0 %v1481, 1
        %v1535 = vpop.permute.xlu0 %1534
        %1536 = vrot.lane.b32.xlu0 %v1482, 1
        %v1537 = vpop.permute.xlu0 %1536
        %1538 = vrot.lane.b32.xlu0 %v1483, 1
        %v1539 = vpop.permute.xlu0 %1538
        %v1548 = vadd.f32 %v1396, %v1525
        %v1549 = vadd.f32 %v1400, %v1527
        %v1550 = vadd.f32 %v1397, %v1529
        %v1551 = vadd.f32 %v1401, %v1531
        %v1552 = vadd.f32 %v1398, %v1533
        %v1553 = vadd.f32 %v1402, %v1535
        %v1554 = vadd.f32 %v1399, %v1537
        %v1555 = vadd.f32 %v1403, %v1539
        %1564 = vrot.lane.b32.xlu0 %v1468, 1
        %v1565 = vpop.permute.xlu0 %1564
        %1566 = vrot.lane.b32.xlu0 %v1469, 1
        %v1567 = vpop.permute.xlu0 %1566
        %1568 = vrot.lane.b32.xlu0 %v1470, 1
        %v1569 = vpop.permute.xlu0 %1568
        %1570 = vrot.lane.b32.xlu0 %v1471, 1
        %v1571 = vpop.permute.xlu0 %1570
        %1572 = vrot.lane.b32.xlu0 %v1472, 1
        %v1573 = vpop.permute.xlu0 %1572
        %1574 = vrot.lane.b32.xlu0 %v1473, 1
        %v1575 = vpop.permute.xlu0 %1574
        %1576 = vrot.lane.b32.xlu0 %v1474, 1
        %v1577 = vpop.permute.xlu0 %1576
        %1578 = vrot.lane.b32.xlu0 %v1475, 1
        %v1579 = vpop.permute.xlu0 %1578
        %v1588 = vsel %vm550, %v1516, %v1565
        %v1589 = vsel %vm550, %v1517, %v1567
        %v1590 = vsel %vm550, %v1518, %v1569
        %v1591 = vsel %vm550, %v1519, %v1571
        %v1592 = vsel %vm550, %v1520, %v1573
        %v1593 = vsel %vm550, %v1521, %v1575
        %v1594 = vsel %vm550, %v1522, %v1577
        %v1595 = vsel %vm550, %v1523, %v1579
        %v1596 = vsel %vm559, %v1588, %v1548
        %v1597 = vsel %vm559, %v1589, %v1549
        %v1598 = vsel %vm559, %v1590, %v1550
        %v1599 = vsel %vm559, %v1591, %v1551
        %v1600 = vsel %vm559, %v1592, %v1552
        %v1601 = vsel %vm559, %v1593, %v1553
        %v1602 = vsel %vm559, %v1594, %v1554
        %v1603 = vsel %vm559, %v1595, %v1555
        %v1604 = vmul.f32 %v207, %v215
        %v1605 = vmul.f32 %v208, %v216
        %v1606 = vmul.f32 %v209, %v217
        %v1607 = vmul.f32 %v210, %v218
        %v1608 = vmul.f32 %v211, %v219
        %v1609 = vmul.f32 %v212, %v220
        %v1610 = vmul.f32 %v213, %v221
        %v1611 = vmul.f32 %v214, %v222
        %v1620 = vrot.slane %v1604, 1
        %v1621 = vrot.slane %v1605, 1
        %v1622 = vsel %vm231, %v1620, %v1621
        %v1623 = vrot.slane %v1606, 1
        %v1624 = vrot.slane %v1607, 1
        %v1625 = vsel %vm231, %v1623, %v1624
        %v1626 = vrot.slane %v1608, 1
        %v1627 = vrot.slane %v1609, 1
        %v1628 = vsel %vm231, %v1626, %v1627
        %v1629 = vrot.slane %v1610, 1
        %v1630 = vrot.slane %v1611, 1
        %v1631 = vsel %vm231, %v1629, %v1630
        %v1640 = vadd.f32 %v1604, %v1622
        %v1641 = vadd.f32 %v1605, %v1621
        %v1642 = vadd.f32 %v1606, %v1625
        %v1643 = vadd.f32 %v1607, %v1624
        %v1644 = vadd.f32 %v1608, %v1628
        %v1645 = vadd.f32 %v1609, %v1627
        %v1646 = vadd.f32 %v1610, %v1631
        %v1647 = vadd.f32 %v1611, %v1630
        %v1648 = vrot.slane %v1604, 2
        %v1649 = vrot.slane %v1605, 2
        %v1650 = vsel %vm260, %v1648, %v1649
        %v1651 = vrot.slane %v1606, 2
        %v1652 = vrot.slane %v1607, 2
        %v1653 = vsel %vm260, %v1651, %v1652
        %v1654 = vrot.slane %v1608, 2
        %v1655 = vrot.slane %v1609, 2
        %v1656 = vsel %vm260, %v1654, %v1655
        %v1657 = vrot.slane %v1610, 2
        %v1658 = vrot.slane %v1611, 2
        %v1659 = vsel %vm260, %v1657, %v1658
        %v1668 = vadd.f32 %v1640, %v1650
        %v1669 = vadd.f32 %v1641, %v1649
        %v1670 = vadd.f32 %v1642, %v1653
        %v1671 = vadd.f32 %v1643, %v1652
        %v1672 = vadd.f32 %v1644, %v1656
        %v1673 = vadd.f32 %v1645, %v1655
        %v1674 = vadd.f32 %v1646, %v1659
        %v1675 = vadd.f32 %v1647, %v1658
        %v1676 = vmul.f32 %v1604, 2.0
        %v1677 = vmul.f32 %v1606, 2.0
        %v1678 = vmul.f32 %v1608, 2.0
        %v1679 = vmul.f32 %v1610, 2.0
        %v1684 = vrot.slane %v1676, 1
        %v1685 = vrot.slane %v1677, 1
        %v1686 = vrot.slane %v1678, 1
        %v1687 = vrot.slane %v1679, 1
        %v1692 = vadd.f32 %v1604, %v1684
        %v1693 = vadd.f32 %v1606, %v1685
        %v1694 = vadd.f32 %v1608, %v1686
        %v1695 = vadd.f32 %v1610, %v1687
        %v1696 = vmul.f32 %v1605, 2.0
        %v1697 = vmul.f32 %v1607, 2.0
        %v1698 = vmul.f32 %v1609, 2.0
        %v1699 = vmul.f32 %v1611, 2.0
        %v1704 = vrot.slane %v1696, 7
        %v1705 = vrot.slane %v1697, 7
        %v1706 = vrot.slane %v1698, 7
        %v1707 = vrot.slane %v1699, 7
        %v1712 = vadd.f32 %v1605, %v1704
        %v1713 = vadd.f32 %v1607, %v1705
        %v1714 = vadd.f32 %v1609, %v1706
        %v1715 = vadd.f32 %v1611, %v1707
        %v1724 = vrot.slane %v1668, 7
        %v1725 = vrot.slane %v1669, 7
        %v1726 = vsel %vm337, %v1724, %v1725
        %v1727 = vrot.slane %v1670, 7
        %v1728 = vrot.slane %v1671, 7
        %v1729 = vsel %vm337, %v1727, %v1728
        %v1730 = vrot.slane %v1672, 7
        %v1731 = vrot.slane %v1673, 7
        %v1732 = vsel %vm337, %v1730, %v1731
        %v1733 = vrot.slane %v1674, 7
        %v1734 = vrot.slane %v1675, 7
        %v1735 = vsel %vm337, %v1733, %v1734
        %v1744 = vsel %vm337, %v1692, %v1724
        %v1745 = vsel %vm337, %v1693, %v1727
        %v1746 = vsel %vm337, %v1694, %v1730
        %v1747 = vsel %vm337, %v1695, %v1733
        %v1748 = vsel %vm231, %v1726, %v1712
        %v1749 = vsel %vm231, %v1729, %v1713
        %v1750 = vsel %vm231, %v1732, %v1714
        %v1751 = vsel %vm231, %v1735, %v1715
        %1760 = vrot.lane.b32.xlu0 %v1744, 127
        %v1761 = vpop.permute.xlu0 %1760
        %1762 = vrot.lane.b32.xlu0 %v1748, 127
        %v1763 = vpop.permute.xlu0 %1762
        %1764 = vrot.lane.b32.xlu0 %v1745, 127
        %v1765 = vpop.permute.xlu0 %1764
        %1766 = vrot.lane.b32.xlu0 %v1749, 127
        %v1767 = vpop.permute.xlu0 %1766
        %1768 = vrot.lane.b32.xlu0 %v1746, 127
        %v1769 = vpop.permute.xlu0 %1768
        %1770 = vrot.lane.b32.xlu0 %v1750, 127
        %v1771 = vpop.permute.xlu0 %1770
        %1772 = vrot.lane.b32.xlu0 %v1747, 127
        %v1773 = vpop.permute.xlu0 %1772
        %1774 = vrot.lane.b32.xlu0 %v1751, 127
        %v1775 = vpop.permute.xlu0 %1774
        %v1784 = vadd.f32 %v1744, %v1761
        %v1785 = vadd.f32 %v1748, %v1763
        %v1786 = vadd.f32 %v1745, %v1765
        %v1787 = vadd.f32 %v1749, %v1767
        %v1788 = vadd.f32 %v1746, %v1769
        %v1789 = vadd.f32 %v1750, %v1771
        %v1790 = vadd.f32 %v1747, %v1773
        %v1791 = vadd.f32 %v1751, %v1775
        %1792 = vrot.lane.b32.xlu0 %v1744, 126
        %v1793 = vpop.permute.xlu0 %1792
        %1794 = vrot.lane.b32.xlu0 %v1748, 126
        %v1795 = vpop.permute.xlu0 %1794
        %1796 = vrot.lane.b32.xlu0 %v1745, 126
        %v1797 = vpop.permute.xlu0 %1796
        %1798 = vrot.lane.b32.xlu0 %v1749, 126
        %v1799 = vpop.permute.xlu0 %1798
        %1800 = vrot.lane.b32.xlu0 %v1746, 126
        %v1801 = vpop.permute.xlu0 %1800
        %1802 = vrot.lane.b32.xlu0 %v1750, 126
        %v1803 = vpop.permute.xlu0 %1802
        %1804 = vrot.lane.b32.xlu0 %v1747, 126
        %v1805 = vpop.permute.xlu0 %1804
        %1806 = vrot.lane.b32.xlu0 %v1751, 126
        %v1807 = vpop.permute.xlu0 %1806
        %v1816 = vadd.f32 %v1784, %v1793
        %v1817 = vadd.f32 %v1785, %v1795
        %v1818 = vadd.f32 %v1786, %v1797
        %v1819 = vadd.f32 %v1787, %v1799
        %v1820 = vadd.f32 %v1788, %v1801
        %v1821 = vadd.f32 %v1789, %v1803
        %v1822 = vadd.f32 %v1790, %v1805
        %v1823 = vadd.f32 %v1791, %v1807
        %v1824 = vmul.f32 %v1744, 2.0
        %v1825 = vmul.f32 %v1748, 2.0
        %v1826 = vmul.f32 %v1745, 2.0
        %v1827 = vmul.f32 %v1749, 2.0
        %v1828 = vmul.f32 %v1746, 2.0
        %v1829 = vmul.f32 %v1750, 2.0
        %v1830 = vmul.f32 %v1747, 2.0
        %v1831 = vmul.f32 %v1751, 2.0
        %1840 = vrot.lane.b32.xlu0 %v1824, 127
        %v1841 = vpop.permute.xlu0 %1840
        %1842 = vrot.lane.b32.xlu0 %v1825, 127
        %v1843 = vpop.permute.xlu0 %1842
        %1844 = vrot.lane.b32.xlu0 %v1826, 127
        %v1845 = vpop.permute.xlu0 %1844
        %1846 = vrot.lane.b32.xlu0 %v1827, 127
        %v1847 = vpop.permute.xlu0 %1846
        %1848 = vrot.lane.b32.xlu0 %v1828, 127
        %v1849 = vpop.permute.xlu0 %1848
        %1850 = vrot.lane.b32.xlu0 %v1829, 127
        %v1851 = vpop.permute.xlu0 %1850
        %1852 = vrot.lane.b32.xlu0 %v1830, 127
        %v1853 = vpop.permute.xlu0 %1852
        %1854 = vrot.lane.b32.xlu0 %v1831, 127
        %v1855 = vpop.permute.xlu0 %1854
        %v1864 = vadd.f32 %v1744, %v1841
        %v1865 = vadd.f32 %v1748, %v1843
        %v1866 = vadd.f32 %v1745, %v1845
        %v1867 = vadd.f32 %v1749, %v1847
        %v1868 = vadd.f32 %v1746, %v1849
        %v1869 = vadd.f32 %v1750, %v1851
        %v1870 = vadd.f32 %v1747, %v1853
        %v1871 = vadd.f32 %v1751, %v1855
        %1872 = vrot.lane.b32.xlu0 %v1824, 1
        %v1873 = vpop.permute.xlu0 %1872
        %1874 = vrot.lane.b32.xlu0 %v1825, 1
        %v1875 = vpop.permute.xlu0 %1874
        %1876 = vrot.lane.b32.xlu0 %v1826, 1
        %v1877 = vpop.permute.xlu0 %1876
        %1878 = vrot.lane.b32.xlu0 %v1827, 1
        %v1879 = vpop.permute.xlu0 %1878
        %1880 = vrot.lane.b32.xlu0 %v1828, 1
        %v1881 = vpop.permute.xlu0 %1880
        %1882 = vrot.lane.b32.xlu0 %v1829, 1
        %v1883 = vpop.permute.xlu0 %1882
        %1884 = vrot.lane.b32.xlu0 %v1830, 1
        %v1885 = vpop.permute.xlu0 %1884
        %1886 = vrot.lane.b32.xlu0 %v1831, 1
        %v1887 = vpop.permute.xlu0 %1886
        %v1896 = vadd.f32 %v1744, %v1873
        %v1897 = vadd.f32 %v1748, %v1875
        %v1898 = vadd.f32 %v1745, %v1877
        %v1899 = vadd.f32 %v1749, %v1879
        %v1900 = vadd.f32 %v1746, %v1881
        %v1901 = vadd.f32 %v1750, %v1883
        %v1902 = vadd.f32 %v1747, %v1885
        %v1903 = vadd.f32 %v1751, %v1887
        %1912 = vrot.lane.b32.xlu0 %v1816, 1
        %v1913 = vpop.permute.xlu0 %1912
        %1914 = vrot.lane.b32.xlu0 %v1817, 1
        %v1915 = vpop.permute.xlu0 %1914
        %1916 = vrot.lane.b32.xlu0 %v1818, 1
        %v1917 = vpop.permute.xlu0 %1916
        %1918 = vrot.lane.b32.xlu0 %v1819, 1
        %v1919 = vpop.permute.xlu0 %1918
        %1920 = vrot.lane.b32.xlu0 %v1820, 1
        %v1921 = vpop.permute.xlu0 %1920
        %1922 = vrot.lane.b32.xlu0 %v1821, 1
        %v1923 = vpop.permute.xlu0 %1922
        %1924 = vrot.lane.b32.xlu0 %v1822, 1
        %v1925 = vpop.permute.xlu0 %1924
        %1926 = vrot.lane.b32.xlu0 %v1823, 1
        %v1927 = vpop.permute.xlu0 %1926
        %v1936 = vsel %vm550, %v1864, %v1913
        %v1937 = vsel %vm550, %v1865, %v1915
        %v1938 = vsel %vm550, %v1866, %v1917
        %v1939 = vsel %vm550, %v1867, %v1919
        %v1940 = vsel %vm550, %v1868, %v1921
        %v1941 = vsel %vm550, %v1869, %v1923
        %v1942 = vsel %vm550, %v1870, %v1925
        %v1943 = vsel %vm550, %v1871, %v1927
        %v1944 = vsel %vm559, %v1936, %v1896
        %v1945 = vsel %vm559, %v1937, %v1897
        %v1946 = vsel %vm559, %v1938, %v1898
        %v1947 = vsel %vm559, %v1939, %v1899
        %v1948 = vsel %vm559, %v1940, %v1900
        %v1949 = vsel %vm559, %v1941, %v1901
        %v1950 = vsel %vm559, %v1942, %v1902
        %v1951 = vsel %vm559, %v1943, %v1903
        %v1952 = vmul.f32 %v560, %v900
        %v1953 = vmul.f32 %v561, %v901
        %v1954 = vmul.f32 %v562, %v902
        %v1955 = vmul.f32 %v563, %v903
        %v1956 = vmul.f32 %v564, %v904
        %v1957 = vmul.f32 %v565, %v905
        %v1958 = vmul.f32 %v566, %v906
        %v1959 = vmul.f32 %v567, %v907
        %v1960 = vmul.f32 %v560, %v560
        %v1961 = vmul.f32 %v561, %v561
        %v1962 = vmul.f32 %v562, %v562
        %v1963 = vmul.f32 %v563, %v563
        %v1964 = vmul.f32 %v564, %v564
        %v1965 = vmul.f32 %v565, %v565
        %v1966 = vmul.f32 %v566, %v566
        %v1967 = vmul.f32 %v567, %v567
        %v1968 = vmul.f32 %v900, %v900
        %v1969 = vmul.f32 %v901, %v901
        %v1970 = vmul.f32 %v902, %v902
        %v1971 = vmul.f32 %v903, %v903
        %v1972 = vmul.f32 %v904, %v904
        %v1973 = vmul.f32 %v905, %v905
        %v1974 = vmul.f32 %v906, %v906
        %v1975 = vmul.f32 %v907, %v907
        %v1976 = vmul.f32 %v1952, 2.0
        %v1977 = vmul.f32 %v1953, 2.0
        %v1978 = vmul.f32 %v1954, 2.0
        %v1979 = vmul.f32 %v1955, 2.0
        %v1980 = vmul.f32 %v1956, 2.0
        %v1981 = vmul.f32 %v1957, 2.0
        %v1982 = vmul.f32 %v1958, 2.0
        %v1983 = vmul.f32 %v1959, 2.0
        %v1984 = vadd.f32 %v1976, 0.0081
        %v1985 = vadd.f32 %v1977, 0.0081
        %v1986 = vadd.f32 %v1978, 0.0081
        %v1987 = vadd.f32 %v1979, 0.0081
        %v1988 = vadd.f32 %v1980, 0.0081
        %v1989 = vadd.f32 %v1981, 0.0081
        %v1990 = vadd.f32 %v1982, 0.0081
        %v1991 = vadd.f32 %v1983, 0.0081
        %v1992 = vmul.f32 %v1944, 18.0
        %v1993 = vmul.f32 %v1945, 18.0
        %v1994 = vmul.f32 %v1946, 18.0
        %v1995 = vmul.f32 %v1947, 18.0
        %v1996 = vmul.f32 %v1948, 18.0
        %v1997 = vmul.f32 %v1949, 18.0
        %v1998 = vmul.f32 %v1950, 18.0
        %v1999 = vmul.f32 %v1951, 18.0
        %v2000 = vsub.f32 %v1992, %v1976
        %v2001 = vsub.f32 %v1993, %v1977
        %v2002 = vsub.f32 %v1994, %v1978
        %v2003 = vsub.f32 %v1995, %v1979
        %v2004 = vsub.f32 %v1996, %v1980
        %v2005 = vsub.f32 %v1997, %v1981
        %v2006 = vsub.f32 %v1998, %v1982
        %v2007 = vsub.f32 %v1999, %v1983
        %v2008 = vadd.f32 %v2000, 0.0729
        %v2009 = vadd.f32 %v2001, 0.0729
        %v2010 = vadd.f32 %v2002, 0.0729
        %v2011 = vadd.f32 %v2003, 0.0729
        %v2012 = vadd.f32 %v2004, 0.0729
        %v2013 = vadd.f32 %v2005, 0.0729
        %v2014 = vadd.f32 %v2006, 0.0729
        %v2015 = vadd.f32 %v2007, 0.0729
        %v2016 = vmul.f32 %v1984, %v2008
        %v2017 = vmul.f32 %v1985, %v2009
        %v2018 = vmul.f32 %v1986, %v2010
        %v2019 = vmul.f32 %v1987, %v2011
        %v2020 = vmul.f32 %v1988, %v2012
        %v2021 = vmul.f32 %v1989, %v2013
        %v2022 = vmul.f32 %v1990, %v2014
        %v2023 = vmul.f32 %v1991, %v2015
        %v2024 = vadd.f32 %v1960, %v1968
        %v2025 = vadd.f32 %v1961, %v1969
        %v2026 = vadd.f32 %v1962, %v1970
        %v2027 = vadd.f32 %v1963, %v1971
        %v2028 = vadd.f32 %v1964, %v1972
        %v2029 = vadd.f32 %v1965, %v1973
        %v2030 = vadd.f32 %v1966, %v1974
        %v2031 = vadd.f32 %v1967, %v1975
        %v2032 = vadd.f32 %v2024, 0.0081
        %v2033 = vadd.f32 %v2025, 0.0081
        %v2034 = vadd.f32 %v2026, 0.0081
        %v2035 = vadd.f32 %v2027, 0.0081
        %v2036 = vadd.f32 %v2028, 0.0081
        %v2037 = vadd.f32 %v2029, 0.0081
        %v2038 = vadd.f32 %v2030, 0.0081
        %v2039 = vadd.f32 %v2031, 0.0081
        %v2040 = vadd.f32 %v1248, %v1596
        %v2041 = vadd.f32 %v1249, %v1597
        %v2042 = vadd.f32 %v1250, %v1598
        %v2043 = vadd.f32 %v1251, %v1599
        %v2044 = vadd.f32 %v1252, %v1600
        %v2045 = vadd.f32 %v1253, %v1601
        %v2046 = vadd.f32 %v1254, %v1602
        %v2047 = vadd.f32 %v1255, %v1603
        %v2048 = vmul.f32 %v2040, 9.0
        %v2049 = vmul.f32 %v2041, 9.0
        %v2050 = vmul.f32 %v2042, 9.0
        %v2051 = vmul.f32 %v2043, 9.0
        %v2052 = vmul.f32 %v2044, 9.0
        %v2053 = vmul.f32 %v2045, 9.0
        %v2054 = vmul.f32 %v2046, 9.0
        %v2055 = vmul.f32 %v2047, 9.0
        %v2056 = vsub.f32 %v2048, %v1960
        %v2057 = vsub.f32 %v2049, %v1961
        %v2058 = vsub.f32 %v2050, %v1962
        %v2059 = vsub.f32 %v2051, %v1963
        %v2060 = vsub.f32 %v2052, %v1964
        %v2061 = vsub.f32 %v2053, %v1965
        %v2062 = vsub.f32 %v2054, %v1966
        %v2063 = vsub.f32 %v2055, %v1967
        %v2064 = vsub.f32 %v2056, %v1968
        %v2065 = vsub.f32 %v2057, %v1969
        %v2066 = vsub.f32 %v2058, %v1970
        %v2067 = vsub.f32 %v2059, %v1971
        %v2068 = vsub.f32 %v2060, %v1972
        %v2069 = vsub.f32 %v2061, %v1973
        %v2070 = vsub.f32 %v2062, %v1974
        %v2071 = vsub.f32 %v2063, %v1975
        %v2072 = vadd.f32 %v2064, 0.0729
        %v2073 = vadd.f32 %v2065, 0.0729
        %v2074 = vadd.f32 %v2066, 0.0729
        %v2075 = vadd.f32 %v2067, 0.0729
        %v2076 = vadd.f32 %v2068, 0.0729
        %v2077 = vadd.f32 %v2069, 0.0729
        %v2078 = vadd.f32 %v2070, 0.0729
        %v2079 = vadd.f32 %v2071, 0.0729
        %v2080 = vmul.f32 %v2032, %v2072
        %v2081 = vmul.f32 %v2033, %v2073
        %v2082 = vmul.f32 %v2034, %v2074
        %v2083 = vmul.f32 %v2035, %v2075
        %v2084 = vmul.f32 %v2036, %v2076
        %v2085 = vmul.f32 %v2037, %v2077
        %v2086 = vmul.f32 %v2038, %v2078
        %v2087 = vmul.f32 %v2039, %v2079
        %v2088 = vrcp.pop %v2080
        %v2089 = vmul.f32 %v2016, %v2088
        %v2090 = vrcp.pop %v2081
        %v2091 = vmul.f32 %v2017, %v2090
        %v2092 = vrcp.pop %v2082
        %v2093 = vmul.f32 %v2018, %v2092
        %v2094 = vrcp.pop %v2083
        %v2095 = vmul.f32 %v2019, %v2094
        %v2096 = vrcp.pop %v2084
        %v2097 = vmul.f32 %v2020, %v2096
        %v2098 = vrcp.pop %v2085
        %v2099 = vmul.f32 %v2021, %v2098
        %v2100 = vrcp.pop %v2086
        %v2101 = vmul.f32 %v2022, %v2100
        %v2102 = vrcp.pop %v2087
        %v2103 = vmul.f32 %v2023, %v2102
        %v2104 = vsub.f32 1.0, %v2089
        %v2105 = vsub.f32 1.0, %v2091
        %v2106 = vsub.f32 1.0, %v2093
        %v2107 = vsub.f32 1.0, %v2095
        %v2108 = vsub.f32 1.0, %v2097
        %v2109 = vsub.f32 1.0, %v2099
        %v2110 = vsub.f32 1.0, %v2101
        %v2111 = vsub.f32 1.0, %v2103
        %v2112 = vmul.f32 %v2104, 0.5
        %v2113 = vmul.f32 %v2105, 0.5
        %v2114 = vmul.f32 %v2106, 0.5
        %v2115 = vmul.f32 %v2107, 0.5
        %v2116 = vmul.f32 %v2108, 0.5
        %v2117 = vmul.f32 %v2109, 0.5
        %v2118 = vmul.f32 %v2110, 0.5
        %v2119 = vmul.f32 %v2111, 0.5
        %v2120 = vmax.f32 %v2112, 0.0
        %v2121 = vmax.f32 %v2113, 0.0
        %v2122 = vmax.f32 %v2114, 0.0
        %v2123 = vmax.f32 %v2115, 0.0
        %v2124 = vmax.f32 %v2116, 0.0
        %v2125 = vmax.f32 %v2117, 0.0
        %v2126 = vmax.f32 %v2118, 0.0
        %v2127 = vmax.f32 %v2119, 0.0
        %v2128 = vmin.f32 %v2120, 1.0
        %v2129 = vmin.f32 %v2121, 1.0
        %v2130 = vmin.f32 %v2122, 1.0
        %v2131 = vmin.f32 %v2123, 1.0
        %v2132 = vmin.f32 %v2124, 1.0
        %v2133 = vmin.f32 %v2125, 1.0
        %v2134 = vmin.f32 %v2126, 1.0
        %v2135 = vmin.f32 %v2127, 1.0
        %vm2136 = vcmask 130048
        %2137 = vst.msk [vmem:[%s203] sm:$0xff] %vm2136, %v2128
        %2138 = vst.msk [vmem:[%s203 + $0x8] sm:$0xff] %vm2136, %v2129
        %2139 = vst.msk [vmem:[%s203 + $0x10] sm:$0xff] %vm2136, %v2130
        %2140 = vst.msk [vmem:[%s203 + $0x18] sm:$0xff] %vm2136, %v2131
        %2141 = vst.msk [vmem:[%s203 + $0x20] sm:$0xff] %vm2136, %v2132
        %2142 = vst.msk [vmem:[%s203 + $0x28] sm:$0xff] %vm2136, %v2133
        %2143 = vst.msk [vmem:[%s203 + $0x30] sm:$0xff] %vm2136, %v2134
        %2144 = vst.msk [vmem:[%s203 + $0x38] sm:$0xff] %vm2136, %v2135
        %s2145 = sand.u32 %s82, 1
        %s2146 = scalar_lea.sflag [#allocation4], %s2145
        %s2147 = sand.u32 %s82, 1
        %s2148 = smul.addr %s2147, 64
        %s2149 = scalar_lea.vmem [#allocation7], %s2148
        // Predicated region
        $region37: #{tpu_custom_call.1} parent=27 // pred_check
          %p2150 = pneg %p92
        $region38: #{tpu_custom_call.1} parent=27 // pred_check_branch
          %2152 = sbr.rel (%p2150) target = $region40
        $region39: #{tpu_custom_call.1} parent=27 // pred_region
          %s2153 = smul.u32 4, %s22
          %s2155 = ssub.s32 1024, 1024
          %2156 = vsyncadd %s2146, %s2155
          %s2157 = smul.addr %s2153, 2
          %s2158 = smul.addr %s2157, 128
          %s2159 = scalar_lea.hbm %s2, %s2158
          %s2160 = sshll.u32 %s2149, 4
          %s2161 = int_to_ptr.vmem [resolvable:$true] %s2160
          %2166 = dma.vmem_to_hbm [thread:$0]  %s2161, 1024, %s2159, %s2146, 128, 128, 8
        $region40: #{tpu_custom_call.1} parent=27 // pred_fallthru
          _
      $region28: #{tpu_custom_call.1} parent=5 // pred_fallthru
        _
      %p2167 = scmp.le.s32.totalorder 2, %s17
      // Predicated region
      $region41: #{tpu_custom_call.1} parent=5 // pred_check
        %p2168 = pneg %p2167
      $region42: #{tpu_custom_call.1} parent=5 // pred_check_branch
        %2170 = sbr.rel (%p2168) target = $region44
      $region43: #{tpu_custom_call.1} parent=5 // pred_region
        %s2171 = ssub.s32 %s17, 2
        // Predicated region
        $region45: #{tpu_custom_call.1} parent=43 // pred_check
          %p2172 = pneg %p98
        $region46: #{tpu_custom_call.1} parent=43 // pred_check_branch
          %2174 = sbr.rel (%p2172) target = $region48
        $region47: #{tpu_custom_call.1} parent=43 // pred_region
          %s2175 = sand.u32 %s83, 1
          %s2176 = scalar_lea.sflag [#allocation4], %s2175
          %s2177 = sand.u32 %s83, 1
          %s2178 = smul.addr %s2177, 64
          %s2179 = scalar_lea.vmem [#allocation7], %s2178
          %2180 = dma.done %s2176, 1024
        $region48: #{tpu_custom_call.1} parent=43 // pred_fallthru
          _
      $region44: #{tpu_custom_call.1} parent=5 // pred_fallthru
        _
    $region6: #{tpu_custom_call.1} parent=1 // loop_footer
      %s21 = sadd.s32 1, %s17
    $region7: #{tpu_custom_call.1} parent=1 // loop_footer_branch
      %16 = sbr.rel target = $region3
    $region8: #{tpu_custom_call.1} parent=1 // loop_exit
      _
    %2181 = vsyncpa [#allocation3], 1
    %s2182 = scalar_lea.sflag [#allocation3], 1
    %2183 = vsyncpa %s2182, 1
    %2184 = vsyncpa [#allocation6], 1
    %s2185 = scalar_lea.sflag [#allocation6], 1
    %2186 = vsyncpa %s2185, 1
    %2187 = vsyncpa [#allocation4], 1
    %s2188 = scalar_lea.sflag [#allocation4], 1
    %2189 = vsyncpa %s2188, 1

</llo_original>
